<compile_context>
chip_gen: v5e
topology: v5e:2x2
jax: 0.10.0
libtpu: 0.0.40
codegen_flags: <defaults>
</compile_context>

<pallas_src>
import functools

import jax
import jax.numpy as jnp
from jax.experimental import pallas as pl
from jax.experimental.pallas import tpu as pltpu

# MXU operand dtype.  bf16 halves weight DMA bytes and is the fast MXU path on
# v6e/v7x; the epilogue stays fp32 so it is also safe on v5e.
MXU_DTYPE = jnp.bfloat16


# ----------------------------------------------------------------------------
# Fused down-block kernel: [conv -> BN -> ReLU] x 2 -> 2x2 max pool
# ----------------------------------------------------------------------------
def _unet_down_block_kernel(x_ref, w1_ref, aff1_ref, w2_ref, aff2_ref,
                            prev_ref, pool_ref, xp1_ref, xp2_ref,
                            *, k, pad, bn_first):
    """Processes one batch element per grid step.

    x_ref    : (1, H, W, Cin)            NHWC input tile (fp32)
    w1_ref   : (k*k*Cin,  Cemb)          conv1 weights, im2col layout (MXU dtype)
    aff1_ref : (2|3, Cemb)               folded BN / bias epilogue params (fp32)
    w2_ref   : (k*k*Cemb, Cout)          conv2 weights
    aff2_ref : (2|3, Cout)
    prev_ref : (1, Cout, Ho2*Wo2)        skip output, flattened NCHW (lane dense)
    pool_ref : (1, Ho2//2, Wo2//2, Cout) pooled output (NHWC, feeds next block)
    xp1_ref  : (H+2p, W+2p, Cin)         VMEM scratch: zero-padded conv1 input
    xp2_ref  : (Ho1+2p, Wo1+2p, Cemb)    VMEM scratch: zero-padded conv2 input
    """
    H, W = x_ref.shape[1], x_ref.shape[2]
    Cemb = w1_ref.shape[1]
    Cout = w2_ref.shape[1]
    Hp1, Wp1 = xp1_ref.shape[0], xp1_ref.shape[1]
    Hp2, Wp2 = xp2_ref.shape[0], xp2_ref.shape[1]
    Ho1, Wo1 = Hp1 - k + 1, Wp1 - k + 1
    Ho2, Wo2 = Hp2 - k + 1, Wp2 - k + 1

    def conv(xp_ref, Ho, Wo, w_ref, aff_ref):
        # im2col: concatenate the k*k shifted windows along the channel axis
        # and run ONE MXU contraction of depth k*k*C.  All offsets/sizes are
        # static Python ints -> static slices, no relayout surprises.
        taps = []
        for dy in range(k):
            for dx in range(k):
                win = xp_ref[pl.ds(dy, Ho), pl.ds(dx, Wo), :]     # (Ho, Wo, C)
                taps.append(win.reshape(Ho * Wo, win.shape[-1]))
        cols = jnp.concatenate(taps, axis=-1)                     # (Ho*Wo, k*k*C)
        acc = jnp.dot(cols.astype(w_ref.dtype), w_ref[...],
                      preferred_element_type=jnp.float32)         # fp32 accum
        aff = aff_ref[...]
        if bn_first:   # conv -> BN -> ReLU (conv bias pre-folded into shift)
            return jnp.maximum(acc * aff[0:1] + aff[1:2], 0.0)
        else:          # conv -> ReLU -> BN
            return jnp.maximum(acc + aff[0:1], 0.0) * aff[1:2] + aff[2:3]

    # ---- conv1: zero-pad the input inside VMEM (no jnp.pad HBM pass) -------
    xp1_ref[...] = jnp.zeros_like(xp1_ref)   # cheap; correct on every core
    xp1_ref[pl.ds(pad, H), pl.ds(pad, W), :] = x_ref[0]
    y1 = conv(xp1_ref, Ho1, Wo1, w1_ref, aff1_ref)                # (Ho1*Wo1, Cemb)

    # ---- conv2: intermediate activation never leaves VMEM ------------------
    xp2_ref[...] = jnp.zeros_like(xp2_ref)
    xp2_ref[pl.ds(pad, Ho1), pl.ds(pad, Wo1), :] = (
        y1.reshape(Ho1, Wo1, Cemb).astype(xp2_ref.dtype))
    y2 = conv(xp2_ref, Ho2, Wo2, w2_ref, aff2_ref)                # (Ho2*Wo2, Cout)

    # ---- skip output: lane-dense flattened-NCHW store -----------------------
    prev_ref[0] = y2.T.astype(prev_ref.dtype)                     # (Cout, Ho2*Wo2)

    # ---- fused 2x2 / stride-2 max pool (PyTorch MaxPool2d(2), floor mode) ---
    He, We = (Ho2 // 2) * 2, (Wo2 // 2) * 2
    y2s = y2.reshape(Ho2, Wo2, Cout)
    r = jnp.maximum(y2s[0:He:2], y2s[1:He:2])
    pool_ref[0] = jnp.maximum(r[:, 0:We:2, :],
                              r[:, 1:We:2, :]).astype(pool_ref.dtype)


# ----------------------------------------------------------------------------
# Conservative fallback (same math, previously validated constructs).  Only
# used if the fused kernel fails to lower on an older Mosaic/libtpu build.
# ----------------------------------------------------------------------------
def _conv_bn_relu_fallback_kernel(x_ref, w_ref, aff_ref, o_ref, *, k, bn_first):
    Hp, Wp, Cin = x_ref.shape[1], x_ref.shape[2], x_ref.shape[3]
    Cout = o_ref.shape[3]
    Ho, Wo = Hp - k + 1, Wp - k + 1
    acc = jnp.zeros((Ho * Wo, Cout), jnp.float32)
    for dy in range(k):
        for dx in range(k):
            xs = x_ref[0, pl.ds(dy, Ho), pl.ds(dx, Wo), :].reshape(Ho * Wo, Cin)
            wt = w_ref[pl.ds((dy * k + dx) * Cin, Cin), :]
            acc = acc + jnp.dot(xs.astype(w_ref.dtype), wt,
                                preferred_element_type=jnp.float32)
    aff = aff_ref[...]
    if bn_first:
        y = jnp.maximum(acc * aff[0:1] + aff[1:2], 0.0)
    else:
        y = jnp.maximum(acc + aff[0:1], 0.0) * aff[1:2] + aff[2:3]
    o_ref[0] = y.reshape(Ho, Wo, Cout).astype(o_ref.dtype)


def _conv_bn_relu_fallback(x, w_flat, aff, *, k, pad, bn_first):
    N, H, W, Cin = x.shape
    Cout = w_flat.shape[1]
    Ho, Wo = H + 2 * pad - k + 1, W + 2 * pad - k + 1
    Hp, Wp = H + 2 * pad, W + 2 * pad
    xp = jnp.pad(x, ((0, 0), (pad, pad), (pad, pad), (0, 0)))
    kernel = functools.partial(_conv_bn_relu_fallback_kernel, k=k,
                               bn_first=bn_first)
    return pl.pallas_call(
        kernel,
        out_shape=jax.ShapeDtypeStruct((N, Ho, Wo, Cout), jnp.float32),
        grid=(N,),
        in_specs=[
            pl.BlockSpec((1, Hp, Wp, Cin), lambda n: (n, 0, 0, 0)),
            pl.BlockSpec(w_flat.shape, lambda n: (0, 0)),
            pl.BlockSpec(aff.shape, lambda n: (0, 0)),
        ],
        out_specs=pl.BlockSpec((1, Ho, Wo, Cout), lambda n: (n, 0, 0, 0)),
        compiler_params=pltpu.CompilerParams(
            dimension_semantics=("parallel",)),
    )(xp, w_flat, aff)


def _maxpool2x2_fallback_kernel(x_ref, o_ref):
    x = x_ref[0]
    H, W = x.shape[0], x.shape[1]
    He, We = (H // 2) * 2, (W // 2) * 2
    r = jnp.maximum(x[0:He:2], x[1:He:2])
    o_ref[0] = jnp.maximum(r[:, 0:We:2, :], r[:, 1:We:2, :])


def _maxpool2x2_fallback(x):
    N, H, W, C = x.shape
    return pl.pallas_call(
        _maxpool2x2_fallback_kernel,
        out_shape=jax.ShapeDtypeStruct((N, H // 2, W // 2, C), x.dtype),
        grid=(N,),
        in_specs=[pl.BlockSpec((1, H, W, C), lambda n: (n, 0, 0, 0))],
        out_specs=pl.BlockSpec((1, H // 2, W // 2, C), lambda n: (n, 0, 0, 0)),
        compiler_params=pltpu.CompilerParams(
            dimension_semantics=("parallel",)),
    )(x)


# ----------------------------------------------------------------------------
# Block wrapper
# ----------------------------------------------------------------------------
def unet_down_block(x_nhwc, block_params, *, kernel_size, padding,
                    bn_first=True):
    """x_nhwc: (N, H, W, Cin) fp32.  Returns (prev_nchw, pooled_nhwc)."""
    N, H, W, Cin = x_nhwc.shape
    k, pad = kernel_size, padding
    w1, aff1 = block_params["w1"], block_params["aff1"]
    w2, aff2 = block_params["w2"], block_params["aff2"]
    Cemb, Cout = w1.shape[1], w2.shape[1]
    Ho1, Wo1 = H + 2 * pad - k + 1, W + 2 * pad - k + 1
    Ho2, Wo2 = Ho1 + 2 * pad - k + 1, Wo1 + 2 * pad - k + 1
    Hpool, Wpool = Ho2 // 2, Wo2 // 2

    kernel = functools.partial(_unet_down_block_kernel, k=k, pad=pad,
                               bn_first=bn_first)
    try:
        prev_flat, pooled = pl.pallas_call(
            kernel,
            out_shape=(
                jax.ShapeDtypeStruct((N, Cout, Ho2 * Wo2), jnp.float32),
                jax.ShapeDtypeStruct((N, Hpool, Wpool, Cout), jnp.float32),
            ),
            grid=(N,),
            in_specs=[
                pl.BlockSpec((1, H, W, Cin), lambda n: (n, 0, 0, 0)),
                pl.BlockSpec(w1.shape, lambda n: (0, 0)),
                pl.BlockSpec(aff1.shape, lambda n: (0, 0)),
                pl.BlockSpec(w2.shape, lambda n: (0, 0)),
                pl.BlockSpec(aff2.shape, lambda n: (0, 0)),
            ],
            out_specs=(
                pl.BlockSpec((1, Cout, Ho2 * Wo2), lambda n: (n, 0, 0)),
                pl.BlockSpec((1, Hpool, Wpool, Cout), lambda n: (n, 0, 0, 0)),
            ),
            scratch_shapes=[
                pltpu.VMEM((H + 2 * pad, W + 2 * pad, Cin), jnp.float32),
                pltpu.VMEM((Ho1 + 2 * pad, Wo1 + 2 * pad, Cemb), jnp.float32),
            ],
            compiler_params=pltpu.CompilerParams(
                dimension_semantics=("parallel",)),
        )(x_nhwc, w1, aff1, w2, aff2)
        prev_nchw = prev_flat.reshape(N, Cout, Ho2, Wo2)  # data already NCHW
    except Exception:  # pragma: no cover - portability fallback, not hot path
        y = _conv_bn_relu_fallback(x_nhwc, w1, aff1, k=k, pad=pad,
                                   bn_first=bn_first)
        y = _conv_bn_relu_fallback(y, w2, aff2, k=k, pad=pad,
                                   bn_first=bn_first)
        pooled = _maxpool2x2_fallback(y)
        prev_nchw = jnp.transpose(y, (0, 3, 1, 2))
    return prev_nchw, pooled


# ----------------------------------------------------------------------------
# Parameter construction (deterministic, synthetic; inference-mode BN folding)
# ----------------------------------------------------------------------------
# TODO(synk): training-mode BatchNorm (batch statistics) is not implemented;
# running-stats inference BN is folded to a per-channel affine.
def _init_conv_bn(key, cin, cout, k, bn_first, eps=1e-5):
    kw, kb, kg, kbe, km, kv = jax.random.split(key, 6)
    w = 0.1 * jax.random.normal(kw, (k, k, cin, cout), jnp.float32)
    b = 0.05 * jax.random.normal(kb, (cout,), jnp.float32)
    gamma = 1.0 + 0.1 * jax.random.normal(kg, (cout,), jnp.float32)
    beta = 0.05 * jax.random.normal(kbe, (cout,), jnp.float32)
    mean = 0.05 * jax.random.normal(km, (cout,), jnp.float32)
    var = 1.0 + 0.1 * jax.random.uniform(kv, (cout,), jnp.float32)
    scale = gamma / jnp.sqrt(var + eps)          # inference BN -> affine
    shift = beta - mean * scale
    w_flat = w.reshape(k * k * cin, cout).astype(MXU_DTYPE)  # im2col layout
    if bn_first:
        # relu((conv + b) * scale + shift) == relu(conv*scale + (shift + b*scale))
        aff = jnp.stack([scale, shift + b * scale], axis=0)
    else:
        aff = jnp.stack([b, scale, shift], axis=0)
    return w_flat, aff.astype(jnp.float32)


def init_unet_encoder_params(key, in_channels, emb_sizes, out_channels,
                             kernel_sizes, bn_first=True):
    params = []
    cin = in_channels
    for emb, cout, k in zip(emb_sizes, out_channels, kernel_sizes):
        key, k1, k2 = jax.random.split(key, 3)
        w1, aff1 = _init_conv_bn(k1, cin, emb, k, bn_first)
        w2, aff2 = _init_conv_bn(k2, emb, cout, k, bn_first)
        params.append(dict(w1=w1, aff1=aff1, w2=w2, aff2=aff2))
        cin = cout
    return params


# ----------------------------------------------------------------------------
# Encoder forward (mirrors UnetEncoder.forward; inputs / outputs in NCHW)
# ----------------------------------------------------------------------------
def unet_encoder(img_input_nchw, params, kernel_sizes, paddings, bn_first=True):
    x = jnp.transpose(img_input_nchw, (0, 2, 3, 1))     # NCHW -> NHWC once
    levels = []
    for block_params, k, p in zip(params, kernel_sizes, paddings):
        prev_nchw, x = unet_down_block(x, block_params, kernel_size=k,
                                       padding=p, bn_first=bn_first)
        levels.append(prev_nchw)                        # already NCHW
    levels.append(jnp.transpose(x, (0, 3, 1, 2)))       # final pooled level
    return img_input_nchw, levels


# ----------------------------------------------------------------------------
if __name__ == "__main__":
    in_channels = 4
    emb_sizes = [8, 16]
    out_channels = [8, 16]
    kernel_sizes = [3, 3]
    paddings = [1, 1]
    batch, H, W = 2, 16, 16

    key = jax.random.PRNGKey(0)
    key, pkey, xkey = jax.random.split(key, 3)
    params = init_unet_encoder_params(pkey, in_channels, emb_sizes,
                                      out_channels, kernel_sizes,
                                      bn_first=True)
    img_input = jax.random.normal(xkey, (batch, in_channels, H, W),
                                  jnp.float32)          # NCHW like PyTorch

    img_out, levels = unet_encoder(img_input, params, kernel_sizes, paddings,
                                   bn_first=True)
    jax.block_until_ready(img_out)
    for lvl in levels:
        jax.block_until_ready(lvl)

    assert img_out.shape == (batch, in_channels, H, W)
    assert levels[0].shape == (batch, out_channels[0], H, W)
    assert levels[1].shape == (batch, out_channels[1], H // 2, W // 2)
    assert levels[2].shape == (batch, out_channels[1], H // 4, W // 4)
    assert all(bool(jnp.isfinite(lvl).all()) for lvl in levels)
    print("KERNEL_OK")
</pallas_src>

<mosaic_0001>
module attributes {stable_mosaic.version = 11 : i64} {
  func.func @_conv_bn_relu_fallback_kernel(%arg0: i32, %arg1: memref<1x18x18x4xf32, #tpu.memory_space<vmem>>, %arg2: memref<36x8xbf16, #tpu.memory_space<vmem>>, %arg3: memref<2x8xf32, #tpu.memory_space<vmem>>, %arg4: memref<1x16x16x8xf32, #tpu.memory_space<vmem>>) attributes {dimension_semantics = [#tpu.dimension_semantics<parallel>], iteration_bounds = array<i64: 2>, scalar_prefetch = 0 : i64, scratch_operands = 0 : i64, tpu.core_type = #tpu.core_type<tc>, window_params = [{transform_indices = @transform_0, window_bounds = array<i64: 1, 18, 18, 4>}, {pipeline_mode = #tpu.pipeline_mode<synchronous>, transform_indices = @transform_1, window_bounds = array<i64: 36, 8>}, {pipeline_mode = #tpu.pipeline_mode<synchronous>, transform_indices = @transform_2, window_bounds = array<i64: 2, 8>}, {transform_indices = @transform_3, window_bounds = array<i64: 1, 16, 16, 8>}]} {
    %cst = arith.constant 0.000000e+00 : f32
    %0 = vector.broadcast %cst : f32 to vector<256x8xf32>
    %c0 = arith.constant 0 : index
    %c0_0 = arith.constant 0 : index
    %c0_1 = arith.constant 0 : index
    %c0_2 = arith.constant 0 : index
    %1 = vector.load %arg1[%c0, %c0_0, %c0_1, %c0_2] : memref<1x18x18x4xf32, #tpu.memory_space<vmem>>, vector<1x16x16x4xf32>
    %2 = vector.shape_cast %1 : vector<1x16x16x4xf32> to vector<16x16x4xf32>
    %3 = vector.shape_cast %2 : vector<16x16x4xf32> to vector<256x4xf32>
    %c0_3 = arith.constant 0 : index
    %c0_4 = arith.constant 0 : index
    %4 = vector.load %arg2[%c0_3, %c0_4] : memref<36x8xbf16, #tpu.memory_space<vmem>>, vector<4x8xbf16>
    %5 = arith.truncf %3 : vector<256x4xf32> to vector<256x4xbf16>
    %cst_5 = arith.constant dense<0.000000e+00> : vector<256x8xf32>
    %6 = tpu.matmul %5, %4, %cst_5 {dimension_numbers = #tpu.dot_dimension_numbers<[1], [0], [0], [1], [0, 0, 1, 1], [], []>} : vector<256x4xbf16>, vector<4x8xbf16>, vector<256x8xf32> -> vector<256x8xf32>
    %7 = arith.addf %0, %6 : vector<256x8xf32>
    %c0_6 = arith.constant 0 : index
    %c0_7 = arith.constant 0 : index
    %c1 = arith.constant 1 : index
    %c0_8 = arith.constant 0 : index
    %8 = vector.load %arg1[%c0_6, %c0_7, %c1, %c0_8] : memref<1x18x18x4xf32, #tpu.memory_space<vmem>>, vector<1x16x16x4xf32>
    %9 = vector.shape_cast %8 : vector<1x16x16x4xf32> to vector<16x16x4xf32>
    %10 = vector.shape_cast %9 : vector<16x16x4xf32> to vector<256x4xf32>
    %c4 = arith.constant 4 : index
    %c0_9 = arith.constant 0 : index
    %11 = vector.load %arg2[%c4, %c0_9] : memref<36x8xbf16, #tpu.memory_space<vmem>>, vector<4x8xbf16>
    %12 = arith.truncf %10 : vector<256x4xf32> to vector<256x4xbf16>
    %cst_10 = arith.constant dense<0.000000e+00> : vector<256x8xf32>
    %13 = tpu.matmul %12, %11, %cst_10 {dimension_numbers = #tpu.dot_dimension_numbers<[1], [0], [0], [1], [0, 0, 1, 1], [], []>} : vector<256x4xbf16>, vector<4x8xbf16>, vector<256x8xf32> -> vector<256x8xf32>
    %14 = arith.addf %7, %13 : vector<256x8xf32>
    %c0_11 = arith.constant 0 : index
    %c0_12 = arith.constant 0 : index
    %c2 = arith.constant 2 : index
    %c0_13 = arith.constant 0 : index
    %15 = vector.load %arg1[%c0_11, %c0_12, %c2, %c0_13] : memref<1x18x18x4xf32, #tpu.memory_space<vmem>>, vector<1x16x16x4xf32>
    %16 = vector.shape_cast %15 : vector<1x16x16x4xf32> to vector<16x16x4xf32>
    %17 = vector.shape_cast %16 : vector<16x16x4xf32> to vector<256x4xf32>
    %c8 = arith.constant 8 : index
    %c0_14 = arith.constant 0 : index
    %18 = vector.load %arg2[%c8, %c0_14] : memref<36x8xbf16, #tpu.memory_space<vmem>>, vector<4x8xbf16>
    %19 = arith.truncf %17 : vector<256x4xf32> to vector<256x4xbf16>
    %cst_15 = arith.constant dense<0.000000e+00> : vector<256x8xf32>
    %20 = tpu.matmul %19, %18, %cst_15 {dimension_numbers = #tpu.dot_dimension_numbers<[1], [0], [0], [1], [0, 0, 1, 1], [], []>} : vector<256x4xbf16>, vector<4x8xbf16>, vector<256x8xf32> -> vector<256x8xf32>
    %21 = arith.addf %14, %20 : vector<256x8xf32>
    %c0_16 = arith.constant 0 : index
    %c1_17 = arith.constant 1 : index
    %c0_18 = arith.constant 0 : index
    %c0_19 = arith.constant 0 : index
    %22 = vector.load %arg1[%c0_16, %c1_17, %c0_18, %c0_19] : memref<1x18x18x4xf32, #tpu.memory_space<vmem>>, vector<1x16x16x4xf32>
    %23 = vector.shape_cast %22 : vector<1x16x16x4xf32> to vector<16x16x4xf32>
    %24 = vector.shape_cast %23 : vector<16x16x4xf32> to vector<256x4xf32>
    %c12 = arith.constant 12 : index
    %c0_20 = arith.constant 0 : index
    %25 = vector.load %arg2[%c12, %c0_20] : memref<36x8xbf16, #tpu.memory_space<vmem>>, vector<4x8xbf16>
    %26 = arith.truncf %24 : vector<256x4xf32> to vector<256x4xbf16>
    %cst_21 = arith.constant dense<0.000000e+00> : vector<256x8xf32>
    %27 = tpu.matmul %26, %25, %cst_21 {dimension_numbers = #tpu.dot_dimension_numbers<[1], [0], [0], [1], [0, 0, 1, 1], [], []>} : vector<256x4xbf16>, vector<4x8xbf16>, vector<256x8xf32> -> vector<256x8xf32>
    %28 = arith.addf %21, %27 : vector<256x8xf32>
    %c0_22 = arith.constant 0 : index
    %c1_23 = arith.constant 1 : index
    %c1_24 = arith.constant 1 : index
    %c0_25 = arith.constant 0 : index
    %29 = vector.load %arg1[%c0_22, %c1_23, %c1_24, %c0_25] : memref<1x18x18x4xf32, #tpu.memory_space<vmem>>, vector<1x16x16x4xf32>
    %30 = vector.shape_cast %29 : vector<1x16x16x4xf32> to vector<16x16x4xf32>
    %31 = vector.shape_cast %30 : vector<16x16x4xf32> to vector<256x4xf32>
    %c16 = arith.constant 16 : index
    %c0_26 = arith.constant 0 : index
    %32 = vector.load %arg2[%c16, %c0_26] : memref<36x8xbf16, #tpu.memory_space<vmem>>, vector<4x8xbf16>
    %33 = arith.truncf %31 : vector<256x4xf32> to vector<256x4xbf16>
    %cst_27 = arith.constant dense<0.000000e+00> : vector<256x8xf32>
    %34 = tpu.matmul %33, %32, %cst_27 {dimension_numbers = #tpu.dot_dimension_numbers<[1], [0], [0], [1], [0, 0, 1, 1], [], []>} : vector<256x4xbf16>, vector<4x8xbf16>, vector<256x8xf32> -> vector<256x8xf32>
    %35 = arith.addf %28, %34 : vector<256x8xf32>
    %c0_28 = arith.constant 0 : index
    %c1_29 = arith.constant 1 : index
    %c2_30 = arith.constant 2 : index
    %c0_31 = arith.constant 0 : index
    %36 = vector.load %arg1[%c0_28, %c1_29, %c2_30, %c0_31] : memref<1x18x18x4xf32, #tpu.memory_space<vmem>>, vector<1x16x16x4xf32>
    %37 = vector.shape_cast %36 : vector<1x16x16x4xf32> to vector<16x16x4xf32>
    %38 = vector.shape_cast %37 : vector<16x16x4xf32> to vector<256x4xf32>
    %c20 = arith.constant 20 : index
    %c0_32 = arith.constant 0 : index
    %39 = vector.load %arg2[%c20, %c0_32] : memref<36x8xbf16, #tpu.memory_space<vmem>>, vector<4x8xbf16>
    %40 = arith.truncf %38 : vector<256x4xf32> to vector<256x4xbf16>
    %cst_33 = arith.constant dense<0.000000e+00> : vector<256x8xf32>
    %41 = tpu.matmul %40, %39, %cst_33 {dimension_numbers = #tpu.dot_dimension_numbers<[1], [0], [0], [1], [0, 0, 1, 1], [], []>} : vector<256x4xbf16>, vector<4x8xbf16>, vector<256x8xf32> -> vector<256x8xf32>
    %42 = arith.addf %35, %41 : vector<256x8xf32>
    %c0_34 = arith.constant 0 : index
    %c2_35 = arith.constant 2 : index
    %c0_36 = arith.constant 0 : index
    %c0_37 = arith.constant 0 : index
    %43 = vector.load %arg1[%c0_34, %c2_35, %c0_36, %c0_37] : memref<1x18x18x4xf32, #tpu.memory_space<vmem>>, vector<1x16x16x4xf32>
    %44 = vector.shape_cast %43 : vector<1x16x16x4xf32> to vector<16x16x4xf32>
    %45 = vector.shape_cast %44 : vector<16x16x4xf32> to vector<256x4xf32>
    %c24 = arith.constant 24 : index
    %c0_38 = arith.constant 0 : index
    %46 = vector.load %arg2[%c24, %c0_38] : memref<36x8xbf16, #tpu.memory_space<vmem>>, vector<4x8xbf16>
    %47 = arith.truncf %45 : vector<256x4xf32> to vector<256x4xbf16>
    %cst_39 = arith.constant dense<0.000000e+00> : vector<256x8xf32>
    %48 = tpu.matmul %47, %46, %cst_39 {dimension_numbers = #tpu.dot_dimension_numbers<[1], [0], [0], [1], [0, 0, 1, 1], [], []>} : vector<256x4xbf16>, vector<4x8xbf16>, vector<256x8xf32> -> vector<256x8xf32>
    %49 = arith.addf %42, %48 : vector<256x8xf32>
    %c0_40 = arith.constant 0 : index
    %c2_41 = arith.constant 2 : index
    %c1_42 = arith.constant 1 : index
    %c0_43 = arith.constant 0 : index
    %50 = vector.load %arg1[%c0_40, %c2_41, %c1_42, %c0_43] : memref<1x18x18x4xf32, #tpu.memory_space<vmem>>, vector<1x16x16x4xf32>
    %51 = vector.shape_cast %50 : vector<1x16x16x4xf32> to vector<16x16x4xf32>
    %52 = vector.shape_cast %51 : vector<16x16x4xf32> to vector<256x4xf32>
    %c28 = arith.constant 28 : index
    %c0_44 = arith.constant 0 : index
    %53 = vector.load %arg2[%c28, %c0_44] : memref<36x8xbf16, #tpu.memory_space<vmem>>, vector<4x8xbf16>
    %54 = arith.truncf %52 : vector<256x4xf32> to vector<256x4xbf16>
    %cst_45 = arith.constant dense<0.000000e+00> : vector<256x8xf32>
    %55 = tpu.matmul %54, %53, %cst_45 {dimension_numbers = #tpu.dot_dimension_numbers<[1], [0], [0], [1], [0, 0, 1, 1], [], []>} : vector<256x4xbf16>, vector<4x8xbf16>, vector<256x8xf32> -> vector<256x8xf32>
    %56 = arith.addf %49, %55 : vector<256x8xf32>
    %c0_46 = arith.constant 0 : index
    %c2_47 = arith.constant 2 : index
    %c2_48 = arith.constant 2 : index
    %c0_49 = arith.constant 0 : index
    %57 = vector.load %arg1[%c0_46, %c2_47, %c2_48, %c0_49] : memref<1x18x18x4xf32, #tpu.memory_space<vmem>>, vector<1x16x16x4xf32>
    %58 = vector.shape_cast %57 : vector<1x16x16x4xf32> to vector<16x16x4xf32>
    %59 = vector.shape_cast %58 : vector<16x16x4xf32> to vector<256x4xf32>
    %c32 = arith.constant 32 : index
    %c0_50 = arith.constant 0 : index
    %60 = vector.load %arg2[%c32, %c0_50] : memref<36x8xbf16, #tpu.memory_space<vmem>>, vector<4x8xbf16>
    %61 = arith.truncf %59 : vector<256x4xf32> to vector<256x4xbf16>
    %cst_51 = arith.constant dense<0.000000e+00> : vector<256x8xf32>
    %62 = tpu.matmul %61, %60, %cst_51 {dimension_numbers = #tpu.dot_dimension_numbers<[1], [0], [0], [1], [0, 0, 1, 1], [], []>} : vector<256x4xbf16>, vector<4x8xbf16>, vector<256x8xf32> -> vector<256x8xf32>
    %63 = arith.addf %56, %62 : vector<256x8xf32>
    %c0_52 = arith.constant 0 : index
    %c0_53 = arith.constant 0 : index
    %64 = vector.load %arg3[%c0_52, %c0_53] : memref<2x8xf32, #tpu.memory_space<vmem>>, vector<2x8xf32>
    %65 = vector.extract_strided_slice %64 {offsets = [0, 0], sizes = [1, 8], strides = [1, 1]} : vector<2x8xf32> to vector<1x8xf32>
    %66 = vector.broadcast %65 : vector<1x8xf32> to vector<256x8xf32>
    %67 = arith.mulf %63, %66 : vector<256x8xf32>
    %68 = vector.extract_strided_slice %64 {offsets = [1, 0], sizes = [1, 8], strides = [1, 1]} : vector<2x8xf32> to vector<1x8xf32>
    %69 = vector.broadcast %68 : vector<1x8xf32> to vector<256x8xf32>
    %70 = arith.addf %67, %69 : vector<256x8xf32>
    %cst_54 = arith.constant 0.000000e+00 : f32
    %71 = vector.broadcast %cst_54 : f32 to vector<256x8xf32>
    %72 = arith.maximumf %70, %71 : vector<256x8xf32>
    %73 = vector.shape_cast %72 : vector<256x8xf32> to vector<16x16x8xf32>
    %c0_55 = arith.constant 0 : index
    %c0_56 = arith.constant 0 : index
    %c0_57 = arith.constant 0 : index
    %c0_58 = arith.constant 0 : index
    %74 = vector.load %arg4[%c0_55, %c0_56, %c0_57, %c0_58] : memref<1x16x16x8xf32, #tpu.memory_space<vmem>>, vector<1x16x16x8xf32>
    %75 = vector.shape_cast %74 : vector<1x16x16x8xf32> to vector<16x16x8xf32>
    %76 = vector.shape_cast %73 : vector<16x16x8xf32> to vector<1x16x16x8xf32>
    tpu.vector_store %arg4[%c0_55, %c0_56, %c0_57, %c0_58], %76 {strides = array<i32>} : memref<1x16x16x8xf32, #tpu.memory_space<vmem>>, vector<1x16x16x8xf32>,
    return
  }
  func.func @transform_0(%arg0: i32) -> (i32, i32, i32, i32) {
    %c0_i32 = arith.constant 0 : i32
    %c0_i32_0 = arith.constant 0 : i32
    %c0_i32_1 = arith.constant 0 : i32
    %c0_i32_2 = arith.constant 0 : i32
    return %arg0, %c0_i32, %c0_i32_0, %c0_i32_1 : i32, i32, i32, i32
  }
  func.func @transform_1(%arg0: i32) -> (i32, i32) {
    %c0_i32 = arith.constant 0 : i32
    %c0_i32_0 = arith.constant 0 : i32
    %c0_i32_1 = arith.constant 0 : i32
    return %c0_i32, %c0_i32_0 : i32, i32
  }
  func.func @transform_2(%arg0: i32) -> (i32, i32) {
    %c0_i32 = arith.constant 0 : i32
    %c0_i32_0 = arith.constant 0 : i32
    %c0_i32_1 = arith.constant 0 : i32
    return %c0_i32, %c0_i32_0 : i32, i32
  }
  func.func @transform_3(%arg0: i32) -> (i32, i32, i32, i32) {
    %c0_i32 = arith.constant 0 : i32
    %c0_i32_0 = arith.constant 0 : i32
    %c0_i32_1 = arith.constant 0 : i32
    %c0_i32_2 = arith.constant 0 : i32
    return %arg0, %c0_i32, %c0_i32_0, %c0_i32_1 : i32, i32, i32, i32
  }
}

</mosaic_0001>

<llo_original>
// kernel: tpu_custom_call.1
$region0: #{tpu_custom_call.1}
  #allocation0 [shape = 'u32[]', space=smem, size = 0x4, offset = 0x4, fixed_abs, tag = 'smem constant byte address 0x4 - core index']
  #allocation1 [shape = 'u32[72,128]{1,0:T(1,128)}', space=vmem, size = 0x9000, scoped, tag = 'internal scratch']
  %s0 = inlined_call_operand.vmem [shape: f32[2,18,18,4], index: 0, kind: input, shape index: {}]
  %s1 = inlined_call_operand.vmem [shape: bf16[36,8], index: 1, kind: input, shape index: {}]
  %s2 = inlined_call_operand.vmem [shape: f32[2,8], index: 2, kind: input, shape index: {}]
  %s3 = inlined_call_operand.vmem [shape: f32[2,16,16,8], index: 3, kind: output, shape index: {}]
  %s4 = sld [smem:[#allocation0]]
  $region45: #{tpu_custom_call.1} parent=0
    _
  %s6 = ssub.s32 1, %s4
  %s7 = scalar_select 0, %s6, %s4
  loop: start=0, step=1, limit=4
  $region2: #{tpu_custom_call.1} parent=0 // loop_pre_header
    _
  $region3: #{tpu_custom_call.1} parent=0 // loop_header
    %s9 = sphi 0, %s13
    %p10 = scmp.ge.s32.totalorder %s9, 4
    %s19 = sphi 0, %s21
    %s22 = sphi 0, %s19
    %s23 = sphi 0, %s22
    %s39 = sphi 0, %s23
    %s43 = sphi 0, %s43
    %s45 = sphi 0, %s43
    %s46 = sphi 0, %s45
    %s60 = sphi 0, %s46
    %s64 = sphi 0, %s64
    %s66 = sphi 0, %s64
    %s67 = sphi 0, %s66
    %s81 = sphi 0, %s67
    %s87 = sphi 0, %s89
    %s90 = sphi 0, %s87
    %s91 = sphi 0, %s90
    %s107 = sphi 0, %s91
  $region4: #{tpu_custom_call.1} parent=0 // loop_header_branch
    %12 = sbr.rel (%p10) target = $region8
  $region5: #{tpu_custom_call.1} parent=0 // loop_body
    %s14 = ssub.s32 %s9, 1
    %s15 = ssub.s32 %s9, 2
    %s16 = sadd.s32 %s9, 1
    %s17 = ssub.s32 %s9, %s16
    %p18 = scmp.eq.s32.totalorder %s17, 0
    %s20 = sadd.s32 %s19, 1
    %s21 = scalar_select %p18, %s19, %s20
    %p24 = pneg %p18
    %p25 = scmp.eq.s32.totalorder %s9, 1
    %p26 = por %p24, %p25
    %p27 = scmp.ne.s32.totalorder %s19, %s22
    %p28 = scmp.eq.s32.totalorder %s9, 0
    %p29 = por %p27, %p28
    %p30 = scmp.ne.s32.totalorder %s19, %s22
    %p31 = scmp.eq.s32.totalorder %s14, 1
    %p32 = por %p30, %p31
    %p33 = scmp.ne.s32.totalorder %s22, %s23
    %p34 = scmp.eq.s32.totalorder %s14, 0
    %p35 = por %p33, %p34
    %p36 = scmp.ne.s32.totalorder %s22, %s23
    %p37 = scmp.eq.s32.totalorder %s15, 1
    %p38 = por %p36, %p37
    %p40 = scmp.ne.s32.totalorder %s23, %s39
    %p41 = scmp.eq.s32.totalorder %s15, 0
    %p42 = por %p40, %p41
    %s44 = sadd.s32 %s43, 1
    %p47 = scmp.eq.s32.totalorder %s9, 1
    %p48 = scmp.ne.s32.totalorder %s43, %s45
    %p49 = scmp.eq.s32.totalorder %s9, 0
    %p50 = por %p48, %p49
    %p51 = scmp.ne.s32.totalorder %s43, %s45
    %p52 = scmp.eq.s32.totalorder %s14, 1
    %p53 = por %p51, %p52
    %p54 = scmp.ne.s32.totalorder %s45, %s46
    %p55 = scmp.eq.s32.totalorder %s14, 0
    %p56 = por %p54, %p55
    %p57 = scmp.ne.s32.totalorder %s45, %s46
    %p58 = scmp.eq.s32.totalorder %s15, 1
    %p59 = por %p57, %p58
    %p61 = scmp.ne.s32.totalorder %s46, %s60
    %p62 = scmp.eq.s32.totalorder %s15, 0
    %p63 = por %p61, %p62
    %s65 = sadd.s32 %s64, 1
    %p68 = scmp.eq.s32.totalorder %s9, 1
    %p69 = scmp.ne.s32.totalorder %s64, %s66
    %p70 = scmp.eq.s32.totalorder %s9, 0
    %p71 = por %p69, %p70
    %p72 = scmp.ne.s32.totalorder %s64, %s66
    %p73 = scmp.eq.s32.totalorder %s14, 1
    %p74 = por %p72, %p73
    %p75 = scmp.ne.s32.totalorder %s66, %s67
    %p76 = scmp.eq.s32.totalorder %s14, 0
    %p77 = por %p75, %p76
    %p78 = scmp.ne.s32.totalorder %s66, %s67
    %p79 = scmp.eq.s32.totalorder %s15, 1
    %p80 = por %p78, %p79
    %p82 = scmp.ne.s32.totalorder %s67, %s81
    %p83 = scmp.eq.s32.totalorder %s15, 0
    %p84 = por %p82, %p83
    %s85 = ssub.s32 %s9, %s16
    %p86 = scmp.eq.s32.totalorder %s85, 0
    %s88 = sadd.s32 %s87, 1
    %s89 = scalar_select %p86, %s87, %s88
    %p92 = pneg %p86
    %p93 = scmp.eq.s32.totalorder %s9, 1
    %p94 = por %p92, %p93
    %p95 = scmp.ne.s32.totalorder %s87, %s90
    %p96 = scmp.eq.s32.totalorder %s9, 0
    %p97 = por %p95, %p96
    %p98 = scmp.ne.s32.totalorder %s87, %s90
    %p99 = scmp.eq.s32.totalorder %s14, 1
    %p100 = por %p98, %p99
    %p101 = scmp.ne.s32.totalorder %s90, %s91
    %p102 = scmp.eq.s32.totalorder %s14, 0
    %p103 = por %p101, %p102
    %p104 = scmp.ne.s32.totalorder %s90, %s91
    %p105 = scmp.eq.s32.totalorder %s15, 1
    %p106 = por %p104, %p105
    %p108 = scmp.ne.s32.totalorder %s91, %s107
    %p109 = scmp.eq.s32.totalorder %s15, 0
    %p110 = por %p108, %p109
    %p111 = scmp.le.s32.totalorder 1, %s9
    %p112 = scmp.lt.s32.totalorder %s9, 3
    %p113 = pnand %p111, %p112
    %p114 = pneg %p113
    // Predicated region
    $region9: #{tpu_custom_call.1} parent=5 // pred_check
      _
    $region10: #{tpu_custom_call.1} parent=5 // pred_check_branch
      %116 = sbr.rel (%p113) target = $region12
    $region11: #{tpu_custom_call.1} parent=5 // pred_region
      %s117 = ssub.s32 %s9, 1
      // Predicated region
      $region13: #{tpu_custom_call.1} parent=11 // pred_check
        %p118 = pneg %p56
      $region14: #{tpu_custom_call.1} parent=11 // pred_check_branch
        %120 = sbr.rel (%p118) target = $region16
      $region15: #{tpu_custom_call.1} parent=11 // pred_region
        _
      $region16: #{tpu_custom_call.1} parent=11 // pred_fallthru
        _
      // Predicated region
      $region17: #{tpu_custom_call.1} parent=11 // pred_check
        %p121 = pneg %p77
      $region18: #{tpu_custom_call.1} parent=11 // pred_check_branch
        %123 = sbr.rel (%p121) target = $region20
      $region19: #{tpu_custom_call.1} parent=11 // pred_region
        _
      $region20: #{tpu_custom_call.1} parent=11 // pred_fallthru
        _
    $region12: #{tpu_custom_call.1} parent=5 // pred_fallthru
      _
    %p124 = scmp.lt.s32.totalorder %s9, 2
    // Predicated region
    $region21: #{tpu_custom_call.1} parent=5 // pred_check
      %p125 = pneg %p124
    $region22: #{tpu_custom_call.1} parent=5 // pred_check_branch
      %127 = sbr.rel (%p125) target = $region24
    $region23: #{tpu_custom_call.1} parent=5 // pred_region
      // Predicated region
      $region25: #{tpu_custom_call.1} parent=23 // pred_check
        %p128 = pneg %p29
      $region26: #{tpu_custom_call.1} parent=23 // pred_check_branch
        %130 = sbr.rel (%p128) target = $region28
      $region27: #{tpu_custom_call.1} parent=23 // pred_region
        %p131 = scmp.lt.s32.totalorder %s9, 1
        %s132 = scalar_select %p131, %s9, 1
        %s133 = smul.addr %s132, 54
        %s134 = smul.addr %s133, 8
        %s135 = scalar_lea.vmem %s0, %s134
      $region28: #{tpu_custom_call.1} parent=23 // pred_fallthru
        _
    $region24: #{tpu_custom_call.1} parent=5 // pred_fallthru
      _
    %p136 = scmp.le.s32.totalorder 1, %s9
    %p137 = scmp.lt.s32.totalorder %s9, 3
    %p138 = pnand %p136, %p137
    %p139 = pneg %p138
    // Predicated region
    $region29: #{tpu_custom_call.1} parent=5 // pred_check
      _
    $region30: #{tpu_custom_call.1} parent=5 // pred_check_branch
      %141 = sbr.rel (%p138) target = $region32
    $region31: #{tpu_custom_call.1} parent=5 // pred_region
      %s142 = ssub.s32 %s9, 1
      %p143 = scmp.lt.s32.totalorder %s14, 1
      %s144 = scalar_select %p143, %s14, 1
      %s145 = smul.addr %s144, 54
      %s146 = smul.addr %s145, 8
      %s147 = scalar_lea.vmem %s0, %s146
      %p148 = pneg %p35
      %p149 = pneg %p32
      %p150 = pneg %p56
      %p151 = pneg %p53
      %p152 = pneg %p77
      %p153 = pneg %p74
      %p154 = pneg %p103
      %p155 = pneg %p100
      %p156 = scmp.lt.s32.totalorder %s14, 1
      %s157 = scalar_select %p156, %s14, 1
      %s158 = smul.addr %s157, 32
      %s159 = smul.addr %s158, 8
      %s160 = scalar_lea.vmem %s3, %s159
      %p161 = scmp.lt.s32.totalorder %s14, 1
      %s162 = scalar_select %p161, %s14, 1
      %s163 = smul.addr %s162, 54
      %s164 = smul.addr %s163, 8
      %s165 = scalar_lea.vmem %s0, %s164
      %p166 = scmp.lt.s32.totalorder %s14, 1
      %s167 = scalar_select %p166, %s14, 1
      %s168 = smul.addr %s167, 32
      %s169 = smul.addr %s168, 8
      %s170 = scalar_lea.vmem %s3, %s169
      %v172 = vld [vmem:[%s165] sm:$0xff]
      %v173 = vld [vmem:[%s165 + $0x8] sm:$0xff]
      %v174 = vld [vmem:[%s165 + $0x18] sm:$0xff]
      %v175 = vld [vmem:[%s165 + $0x20] sm:$0xff]
      %v176 = vld [vmem:[%s165 + $0x30] sm:$0xff]
      %v177 = vld [vmem:[%s165 + $0x38] sm:$0xff]
      %v178 = vld [vmem:[%s165 + $0x48] sm:$0xff]
      %v179 = vld [vmem:[%s165 + $0x50] sm:$0xff]
      %v180 = vld [vmem:[%s165 + $0x60] sm:$0xff]
      %v181 = vld [vmem:[%s165 + $0x68] sm:$0xff]
      %v182 = vld [vmem:[%s165 + $0x78] sm:$0xff]
      %v183 = vld [vmem:[%s165 + $0x80] sm:$0xff]
      %v184 = vld [vmem:[%s165 + $0x90] sm:$0xff]
      %v185 = vld [vmem:[%s165 + $0x98] sm:$0xff]
      %v186 = vld [vmem:[%s165 + $0xa8] sm:$0xff]
      %v187 = vld [vmem:[%s165 + $0xb0] sm:$0xff]
      %v188 = vld [vmem:[%s165 + $0xc0] sm:$0xff]
      %v189 = vld [vmem:[%s165 + $0xc8] sm:$0xff]
      %v190 = vld [vmem:[%s165 + $0xd8] sm:$0xff]
      %v191 = vld [vmem:[%s165 + $0xe0] sm:$0xff]
      %v192 = vld [vmem:[%s165 + $0xf0] sm:$0xff]
      %v193 = vld [vmem:[%s165 + $0xf8] sm:$0xff]
      %v194 = vld [vmem:[%s165 + $0x108] sm:$0xff]
      %v195 = vld [vmem:[%s165 + $0x110] sm:$0xff]
      %v196 = vld [vmem:[%s165 + $0x120] sm:$0xff]
      %v197 = vld [vmem:[%s165 + $0x128] sm:$0xff]
      %v198 = vld [vmem:[%s165 + $0x138] sm:$0xff]
      %v199 = vld [vmem:[%s165 + $0x140] sm:$0xff]
      %v200 = vld [vmem:[%s165 + $0x150] sm:$0xff]
      %v201 = vld [vmem:[%s165 + $0x158] sm:$0xff]
      %v202 = vld [vmem:[%s165 + $0x168] sm:$0xff]
      %v203 = vld [vmem:[%s165 + $0x170] sm:$0xff]
      %v204 = vld [vmem:[%s1] sm:$0x3]
      %v205 = vpack.c.bf16 %v173, %v172
      %v206 = vpack.c.bf16 %v175, %v174
      %v207 = vpack.c.bf16 %v177, %v176
      %v208 = vpack.c.bf16 %v179, %v178
      %v209 = vpack.c.bf16 %v181, %v180
      %v210 = vpack.c.bf16 %v183, %v182
      %v211 = vpack.c.bf16 %v185, %v184
      %v212 = vpack.c.bf16 %v187, %v186
      %v213 = vpack.c.bf16 %v189, %v188
      %v214 = vpack.c.bf16 %v191, %v190
      %v215 = vpack.c.bf16 %v193, %v192
      %v216 = vpack.c.bf16 %v195, %v194
      %v217 = vpack.c.bf16 %v197, %v196
      %v218 = vpack.c.bf16 %v199, %v198
      %v219 = vpack.c.bf16 %v201, %v200
      %v220 = vpack.c.bf16 %v203, %v202
      %v221 = vld [vmem:[%s165 + $0x1] sm:$0xff]
      %v222 = vld [vmem:[%s165 + $0x9] sm:$0xff]
      %v223 = vld [vmem:[%s165 + $0x19] sm:$0xff]
      %v224 = vld [vmem:[%s165 + $0x21] sm:$0xff]
      %v225 = vld [vmem:[%s165 + $0x31] sm:$0xff]
      %v226 = vld [vmem:[%s165 + $0x39] sm:$0xff]
      %v227 = vld [vmem:[%s165 + $0x49] sm:$0xff]
      %v228 = vld [vmem:[%s165 + $0x51] sm:$0xff]
      %v229 = vld [vmem:[%s165 + $0x61] sm:$0xff]
      %v230 = vld [vmem:[%s165 + $0x69] sm:$0xff]
      %v231 = vld [vmem:[%s165 + $0x79] sm:$0xff]
      %v232 = vld [vmem:[%s165 + $0x81] sm:$0xff]
      %v233 = vld [vmem:[%s165 + $0x91] sm:$0xff]
      %v234 = vld [vmem:[%s165 + $0x99] sm:$0xff]
      %v235 = vld [vmem:[%s165 + $0xa9] sm:$0xff]
      %v236 = vld [vmem:[%s165 + $0xb1] sm:$0xff]
      %v237 = vld [vmem:[%s165 + $0xc1] sm:$0xff]
      %v238 = vld [vmem:[%s165 + $0xc9] sm:$0xff]
      %v239 = vld [vmem:[%s165 + $0xd9] sm:$0xff]
      %v240 = vld [vmem:[%s165 + $0xe1] sm:$0xff]
      %v241 = vld [vmem:[%s165 + $0xf1] sm:$0xff]
      %v242 = vld [vmem:[%s165 + $0xf9] sm:$0xff]
      %v243 = vld [vmem:[%s165 + $0x109] sm:$0xff]
      %v244 = vld [vmem:[%s165 + $0x111] sm:$0xff]
      %v245 = vld [vmem:[%s165 + $0x121] sm:$0xff]
      %v246 = vld [vmem:[%s165 + $0x129] sm:$0xff]
      %v247 = vld [vmem:[%s165 + $0x139] sm:$0xff]
      %v248 = vld [vmem:[%s165 + $0x141] sm:$0xff]
      %v249 = vld [vmem:[%s165 + $0x151] sm:$0xff]
      %v250 = vld [vmem:[%s165 + $0x159] sm:$0xff]
      %v251 = vld [vmem:[%s165 + $0x169] sm:$0xff]
      %v252 = vld [vmem:[%s165 + $0x171] sm:$0xff]
      %v253 = vld [vmem:[%s1] sm:$0xc]
      %v254 = vpack.c.bf16 %v222, %v221
      %v255 = vpack.c.bf16 %v224, %v223
      %v256 = vpack.c.bf16 %v226, %v225
      %v257 = vpack.c.bf16 %v228, %v227
      %v258 = vpack.c.bf16 %v230, %v229
      %v259 = vpack.c.bf16 %v232, %v231
      %v260 = vpack.c.bf16 %v234, %v233
      %v261 = vpack.c.bf16 %v236, %v235
      %v262 = vpack.c.bf16 %v238, %v237
      %v263 = vpack.c.bf16 %v240, %v239
      %v264 = vpack.c.bf16 %v242, %v241
      %v265 = vpack.c.bf16 %v244, %v243
      %v266 = vpack.c.bf16 %v246, %v245
      %v267 = vpack.c.bf16 %v248, %v247
      %v268 = vpack.c.bf16 %v250, %v249
      %v269 = vpack.c.bf16 %v252, %v251
      %v271 = vunpack.c.l.b16 %v253
      %v272 = vpack.c.b16 %v271, %v271
      %v273 = vrot.slane %v272, 2
      %vm274 = vcmask 31744
      %v276 = vsel %vm274, %v254, 0
      %v279 = vsel %vm274, %v255, 0
      %v282 = vsel %vm274, %v256, 0
      %v285 = vsel %vm274, %v257, 0
      %v288 = vsel %vm274, %v258, 0
      %v291 = vsel %vm274, %v259, 0
      %v294 = vsel %vm274, %v260, 0
      %v297 = vsel %vm274, %v261, 0
      %v300 = vsel %vm274, %v262, 0
      %v303 = vsel %vm274, %v263, 0
      %v306 = vsel %vm274, %v264, 0
      %v309 = vsel %vm274, %v265, 0
      %v312 = vsel %vm274, %v266, 0
      %v315 = vsel %vm274, %v267, 0
      %v318 = vsel %vm274, %v268, 0
      %v321 = vsel %vm274, %v269, 0
      %vm323 = vcmask 1041408
      %v325 = vsel %vm323, %v273, 0
      %327 = vmatpush.bf16.msra.mxu0 0
      %328 = vmatpush.bf16.msra.mxu0 0
      %329 = vmatpush.bf16.msra.mxu0 0
      %330 = vmatpush.bf16.msra.mxu0 0
      %331 = vmatpush.bf16.msra.mxu0 0
      %332 = vmatpush.bf16.msra.mxu0 0
      %333 = vmatpush.bf16.msra.mxu0 0
      %334 = vmatpush.bf16.msra.mxu0 %v325
      %335 = vmatmul.bf16.gmra.mxu0 %v276
      %v336 = vpop.f32.mrf.mxu0
      %v337 = vadd.f32 0.0, %v336
      %v338 = vpop.f32.mrf.mxu0
      %v339 = vadd.f32 0.0, %v338
      %340 = vmatmul.bf16.gmra.mxu0 %v279
      %v341 = vpop.f32.mrf.mxu0
      %v342 = vadd.f32 0.0, %v341
      %v343 = vpop.f32.mrf.mxu0
      %v344 = vadd.f32 0.0, %v343
      %345 = vmatmul.bf16.gmra.mxu0 %v282
      %v346 = vpop.f32.mrf.mxu0
      %v347 = vadd.f32 0.0, %v346
      %v348 = vpop.f32.mrf.mxu0
      %v349 = vadd.f32 0.0, %v348
      %350 = vmatmul.bf16.gmra.mxu0 %v285
      %v351 = vpop.f32.mrf.mxu0
      %v352 = vadd.f32 0.0, %v351
      %v353 = vpop.f32.mrf.mxu0
      %v354 = vadd.f32 0.0, %v353
      %355 = vmatmul.bf16.gmra.mxu0 %v288
      %v356 = vpop.f32.mrf.mxu0
      %v357 = vadd.f32 0.0, %v356
      %v358 = vpop.f32.mrf.mxu0
      %v359 = vadd.f32 0.0, %v358
      %360 = vmatmul.bf16.gmra.mxu0 %v291
      %v361 = vpop.f32.mrf.mxu0
      %v362 = vadd.f32 0.0, %v361
      %v363 = vpop.f32.mrf.mxu0
      %v364 = vadd.f32 0.0, %v363
      %365 = vmatmul.bf16.gmra.mxu0 %v294
      %v366 = vpop.f32.mrf.mxu0
      %v367 = vadd.f32 0.0, %v366
      %v368 = vpop.f32.mrf.mxu0
      %v369 = vadd.f32 0.0, %v368
      %370 = vmatmul.bf16.gmra.mxu0 %v297
      %v371 = vpop.f32.mrf.mxu0
      %v372 = vadd.f32 0.0, %v371
      %v373 = vpop.f32.mrf.mxu0
      %v374 = vadd.f32 0.0, %v373
      %375 = vmatmul.bf16.gmra.mxu0 %v300
      %v376 = vpop.f32.mrf.mxu0
      %v377 = vadd.f32 0.0, %v376
      %v378 = vpop.f32.mrf.mxu0
      %v379 = vadd.f32 0.0, %v378
      %380 = vmatmul.bf16.gmra.mxu0 %v303
      %v381 = vpop.f32.mrf.mxu0
      %v382 = vadd.f32 0.0, %v381
      %v383 = vpop.f32.mrf.mxu0
      %v384 = vadd.f32 0.0, %v383
      %385 = vmatmul.bf16.gmra.mxu0 %v306
      %v386 = vpop.f32.mrf.mxu0
      %v387 = vadd.f32 0.0, %v386
      %v388 = vpop.f32.mrf.mxu0
      %v389 = vadd.f32 0.0, %v388
      %390 = vmatmul.bf16.gmra.mxu0 %v309
      %v391 = vpop.f32.mrf.mxu0
      %v392 = vadd.f32 0.0, %v391
      %v393 = vpop.f32.mrf.mxu0
      %v394 = vadd.f32 0.0, %v393
      %395 = vmatmul.bf16.gmra.mxu0 %v312
      %v396 = vpop.f32.mrf.mxu0
      %v397 = vadd.f32 0.0, %v396
      %v398 = vpop.f32.mrf.mxu0
      %v399 = vadd.f32 0.0, %v398
      %400 = vmatmul.bf16.gmra.mxu0 %v315
      %v401 = vpop.f32.mrf.mxu0
      %v402 = vadd.f32 0.0, %v401
      %v403 = vpop.f32.mrf.mxu0
      %v404 = vadd.f32 0.0, %v403
      %405 = vmatmul.bf16.gmra.mxu0 %v318
      %v406 = vpop.f32.mrf.mxu0
      %v407 = vadd.f32 0.0, %v406
      %v408 = vpop.f32.mrf.mxu0
      %v409 = vadd.f32 0.0, %v408
      %410 = vmatmul.bf16.gmra.mxu0 %v321
      %v411 = vpop.f32.mrf.mxu0
      %v412 = vadd.f32 0.0, %v411
      %v413 = vpop.f32.mrf.mxu0
      %v414 = vadd.f32 0.0, %v413
      %415 = vdwg.mxu0
      %v417 = vsel %vm274, %v205, 0
      %v420 = vsel %vm274, %v206, 0
      %v423 = vsel %vm274, %v207, 0
      %v426 = vsel %vm274, %v208, 0
      %v429 = vsel %vm274, %v209, 0
      %v432 = vsel %vm274, %v210, 0
      %v435 = vsel %vm274, %v211, 0
      %v438 = vsel %vm274, %v212, 0
      %v441 = vsel %vm274, %v213, 0
      %v444 = vsel %vm274, %v214, 0
      %v447 = vsel %vm274, %v215, 0
      %v450 = vsel %vm274, %v216, 0
      %v453 = vsel %vm274, %v217, 0
      %v456 = vsel %vm274, %v218, 0
      %v459 = vsel %vm274, %v219, 0
      %v462 = vsel %vm274, %v220, 0
      %v465 = vsel %vm323, %v204, 0
      %467 = vmatpush.bf16.msra.mxu0 0
      %468 = vmatpush.bf16.msra.mxu0 0
      %469 = vmatpush.bf16.msra.mxu0 0
      %470 = vmatpush.bf16.msra.mxu0 0
      %471 = vmatpush.bf16.msra.mxu0 0
      %472 = vmatpush.bf16.msra.mxu0 0
      %473 = vmatpush.bf16.msra.mxu0 0
      %474 = vmatpush.bf16.msra.mxu0 %v465
      %475 = vmatmul.bf16.gmra.mxu0 %v417
      %v476 = vpop.f32.mrf.mxu0
      %v477 = vadd.f32 %v337, %v476
      %v478 = vpop.f32.mrf.mxu0
      %v479 = vadd.f32 %v339, %v478
      %480 = vmatmul.bf16.gmra.mxu0 %v420
      %v481 = vpop.f32.mrf.mxu0
      %v482 = vadd.f32 %v342, %v481
      %v483 = vpop.f32.mrf.mxu0
      %v484 = vadd.f32 %v344, %v483
      %485 = vmatmul.bf16.gmra.mxu0 %v423
      %v486 = vpop.f32.mrf.mxu0
      %v487 = vadd.f32 %v347, %v486
      %v488 = vpop.f32.mrf.mxu0
      %v489 = vadd.f32 %v349, %v488
      %490 = vmatmul.bf16.gmra.mxu0 %v426
      %v491 = vpop.f32.mrf.mxu0
      %v492 = vadd.f32 %v352, %v491
      %v493 = vpop.f32.mrf.mxu0
      %v494 = vadd.f32 %v354, %v493
      %495 = vmatmul.bf16.gmra.mxu0 %v429
      %v496 = vpop.f32.mrf.mxu0
      %v497 = vadd.f32 %v357, %v496
      %v498 = vpop.f32.mrf.mxu0
      %v499 = vadd.f32 %v359, %v498
      %500 = vmatmul.bf16.gmra.mxu0 %v432
      %v501 = vpop.f32.mrf.mxu0
      %v502 = vadd.f32 %v362, %v501
      %v503 = vpop.f32.mrf.mxu0
      %v504 = vadd.f32 %v364, %v503
      %505 = vmatmul.bf16.gmra.mxu0 %v435
      %v506 = vpop.f32.mrf.mxu0
      %v507 = vadd.f32 %v367, %v506
      %v508 = vpop.f32.mrf.mxu0
      %v509 = vadd.f32 %v369, %v508
      %510 = vmatmul.bf16.gmra.mxu0 %v438
      %v511 = vpop.f32.mrf.mxu0
      %v512 = vadd.f32 %v372, %v511
      %v513 = vpop.f32.mrf.mxu0
      %v514 = vadd.f32 %v374, %v513
      %515 = vmatmul.bf16.gmra.mxu0 %v441
      %v516 = vpop.f32.mrf.mxu0
      %v517 = vadd.f32 %v377, %v516
      %v518 = vpop.f32.mrf.mxu0
      %v519 = vadd.f32 %v379, %v518
      %520 = vmatmul.bf16.gmra.mxu0 %v444
      %v521 = vpop.f32.mrf.mxu0
      %v522 = vadd.f32 %v382, %v521
      %v523 = vpop.f32.mrf.mxu0
      %v524 = vadd.f32 %v384, %v523
      %525 = vmatmul.bf16.gmra.mxu0 %v447
      %v526 = vpop.f32.mrf.mxu0
      %v527 = vadd.f32 %v387, %v526
      %v528 = vpop.f32.mrf.mxu0
      %v529 = vadd.f32 %v389, %v528
      %530 = vmatmul.bf16.gmra.mxu0 %v450
      %v531 = vpop.f32.mrf.mxu0
      %v532 = vadd.f32 %v392, %v531
      %v533 = vpop.f32.mrf.mxu0
      %v534 = vadd.f32 %v394, %v533
      %535 = vmatmul.bf16.gmra.mxu0 %v453
      %v536 = vpop.f32.mrf.mxu0
      %v537 = vadd.f32 %v397, %v536
      %v538 = vpop.f32.mrf.mxu0
      %v539 = vadd.f32 %v399, %v538
      %540 = vmatmul.bf16.gmra.mxu0 %v456
      %v541 = vpop.f32.mrf.mxu0
      %v542 = vadd.f32 %v402, %v541
      %v543 = vpop.f32.mrf.mxu0
      %v544 = vadd.f32 %v404, %v543
      %545 = vmatmul.bf16.gmra.mxu0 %v459
      %v546 = vpop.f32.mrf.mxu0
      %v547 = vadd.f32 %v407, %v546
      %v548 = vpop.f32.mrf.mxu0
      %v549 = vadd.f32 %v409, %v548
      %550 = vmatmul.bf16.gmra.mxu0 %v462
      %v551 = vpop.f32.mrf.mxu0
      %v552 = vadd.f32 %v412, %v551
      %v553 = vpop.f32.mrf.mxu0
      %v554 = vadd.f32 %v414, %v553
      %555 = vdwg.mxu0
      %v556 = vld [vmem:[%s165 + $0x2] sm:$0xff]
      %v557 = vld [vmem:[%s165 + $0xa] sm:$0xff]
      %v558 = vld [vmem:[%s165 + $0x1a] sm:$0xff]
      %v559 = vld [vmem:[%s165 + $0x22] sm:$0xff]
      %v560 = vld [vmem:[%s165 + $0x32] sm:$0xff]
      %v561 = vld [vmem:[%s165 + $0x3a] sm:$0xff]
      %v562 = vld [vmem:[%s165 + $0x4a] sm:$0xff]
      %v563 = vld [vmem:[%s165 + $0x52] sm:$0xff]
      %v564 = vld [vmem:[%s165 + $0x62] sm:$0xff]
      %v565 = vld [vmem:[%s165 + $0x6a] sm:$0xff]
      %v566 = vld [vmem:[%s165 + $0x7a] sm:$0xff]
      %v567 = vld [vmem:[%s165 + $0x82] sm:$0xff]
      %v568 = vld [vmem:[%s165 + $0x92] sm:$0xff]
      %v569 = vld [vmem:[%s165 + $0x9a] sm:$0xff]
      %v570 = vld [vmem:[%s165 + $0xaa] sm:$0xff]
      %v571 = vld [vmem:[%s165 + $0xb2] sm:$0xff]
      %v572 = vld [vmem:[%s165 + $0xc2] sm:$0xff]
      %v573 = vld [vmem:[%s165 + $0xca] sm:$0xff]
      %v574 = vld [vmem:[%s165 + $0xda] sm:$0xff]
      %v575 = vld [vmem:[%s165 + $0xe2] sm:$0xff]
      %v576 = vld [vmem:[%s165 + $0xf2] sm:$0xff]
      %v577 = vld [vmem:[%s165 + $0xfa] sm:$0xff]
      %v578 = vld [vmem:[%s165 + $0x10a] sm:$0xff]
      %v579 = vld [vmem:[%s165 + $0x112] sm:$0xff]
      %v580 = vld [vmem:[%s165 + $0x122] sm:$0xff]
      %v581 = vld [vmem:[%s165 + $0x12a] sm:$0xff]
      %v582 = vld [vmem:[%s165 + $0x13a] sm:$0xff]
      %v583 = vld [vmem:[%s165 + $0x142] sm:$0xff]
      %v584 = vld [vmem:[%s165 + $0x152] sm:$0xff]
      %v585 = vld [vmem:[%s165 + $0x15a] sm:$0xff]
      %v586 = vld [vmem:[%s165 + $0x16a] sm:$0xff]
      %v587 = vld [vmem:[%s165 + $0x172] sm:$0xff]
      %v588 = vld [vmem:[%s1 + $0x4] sm:$0x3]
      %v589 = vpack.c.bf16 %v557, %v556
      %v590 = vpack.c.bf16 %v559, %v558
      %v591 = vpack.c.bf16 %v561, %v560
      %v592 = vpack.c.bf16 %v563, %v562
      %v593 = vpack.c.bf16 %v565, %v564
      %v594 = vpack.c.bf16 %v567, %v566
      %v595 = vpack.c.bf16 %v569, %v568
      %v596 = vpack.c.bf16 %v571, %v570
      %v597 = vpack.c.bf16 %v573, %v572
      %v598 = vpack.c.bf16 %v575, %v574
      %v599 = vpack.c.bf16 %v577, %v576
      %v600 = vpack.c.bf16 %v579, %v578
      %v601 = vpack.c.bf16 %v581, %v580
      %v602 = vpack.c.bf16 %v583, %v582
      %v603 = vpack.c.bf16 %v585, %v584
      %v604 = vpack.c.bf16 %v587, %v586
      %v606 = vsel %vm274, %v589, 0
      %v609 = vsel %vm274, %v590, 0
      %v612 = vsel %vm274, %v591, 0
      %v615 = vsel %vm274, %v592, 0
      %v618 = vsel %vm274, %v593, 0
      %v621 = vsel %vm274, %v594, 0
      %v624 = vsel %vm274, %v595, 0
      %v627 = vsel %vm274, %v596, 0
      %v630 = vsel %vm274, %v597, 0
      %v633 = vsel %vm274, %v598, 0
      %v636 = vsel %vm274, %v599, 0
      %v639 = vsel %vm274, %v600, 0
      %v642 = vsel %vm274, %v601, 0
      %v645 = vsel %vm274, %v602, 0
      %v648 = vsel %vm274, %v603, 0
      %v651 = vsel %vm274, %v604, 0
      %v654 = vsel %vm323, %v588, 0
      %656 = vmatpush.bf16.msra.mxu0 0
      %657 = vmatpush.bf16.msra.mxu0 0
      %658 = vmatpush.bf16.msra.mxu0 0
      %659 = vmatpush.bf16.msra.mxu0 0
      %660 = vmatpush.bf16.msra.mxu0 0
      %661 = vmatpush.bf16.msra.mxu0 0
      %662 = vmatpush.bf16.msra.mxu0 0
      %663 = vmatpush.bf16.msra.mxu0 %v654
      %664 = vmatmul.bf16.gmra.mxu0 %v606
      %v665 = vpop.f32.mrf.mxu0
      %v666 = vadd.f32 0.0, %v665
      %v667 = vpop.f32.mrf.mxu0
      %v668 = vadd.f32 0.0, %v667
      %669 = vmatmul.bf16.gmra.mxu0 %v609
      %v670 = vpop.f32.mrf.mxu0
      %v671 = vadd.f32 0.0, %v670
      %v672 = vpop.f32.mrf.mxu0
      %v673 = vadd.f32 0.0, %v672
      %674 = vmatmul.bf16.gmra.mxu0 %v612
      %v675 = vpop.f32.mrf.mxu0
      %v676 = vadd.f32 0.0, %v675
      %v677 = vpop.f32.mrf.mxu0
      %v678 = vadd.f32 0.0, %v677
      %679 = vmatmul.bf16.gmra.mxu0 %v615
      %v680 = vpop.f32.mrf.mxu0
      %v681 = vadd.f32 0.0, %v680
      %v682 = vpop.f32.mrf.mxu0
      %v683 = vadd.f32 0.0, %v682
      %684 = vmatmul.bf16.gmra.mxu0 %v618
      %v685 = vpop.f32.mrf.mxu0
      %v686 = vadd.f32 0.0, %v685
      %v687 = vpop.f32.mrf.mxu0
      %v688 = vadd.f32 0.0, %v687
      %689 = vmatmul.bf16.gmra.mxu0 %v621
      %v690 = vpop.f32.mrf.mxu0
      %v691 = vadd.f32 0.0, %v690
      %v692 = vpop.f32.mrf.mxu0
      %v693 = vadd.f32 0.0, %v692
      %694 = vmatmul.bf16.gmra.mxu0 %v624
      %v695 = vpop.f32.mrf.mxu0
      %v696 = vadd.f32 0.0, %v695
      %v697 = vpop.f32.mrf.mxu0
      %v698 = vadd.f32 0.0, %v697
      %699 = vmatmul.bf16.gmra.mxu0 %v627
      %v700 = vpop.f32.mrf.mxu0
      %v701 = vadd.f32 0.0, %v700
      %v702 = vpop.f32.mrf.mxu0
      %v703 = vadd.f32 0.0, %v702
      %704 = vmatmul.bf16.gmra.mxu0 %v630
      %v705 = vpop.f32.mrf.mxu0
      %v706 = vadd.f32 0.0, %v705
      %v707 = vpop.f32.mrf.mxu0
      %v708 = vadd.f32 0.0, %v707
      %709 = vmatmul.bf16.gmra.mxu0 %v633
      %v710 = vpop.f32.mrf.mxu0
      %v711 = vadd.f32 0.0, %v710
      %v712 = vpop.f32.mrf.mxu0
      %v713 = vadd.f32 0.0, %v712
      %714 = vmatmul.bf16.gmra.mxu0 %v636
      %v715 = vpop.f32.mrf.mxu0
      %v716 = vadd.f32 0.0, %v715
      %v717 = vpop.f32.mrf.mxu0
      %v718 = vadd.f32 0.0, %v717
      %719 = vmatmul.bf16.gmra.mxu0 %v639
      %v720 = vpop.f32.mrf.mxu0
      %v721 = vadd.f32 0.0, %v720
      %v722 = vpop.f32.mrf.mxu0
      %v723 = vadd.f32 0.0, %v722
      %724 = vmatmul.bf16.gmra.mxu0 %v642
      %v725 = vpop.f32.mrf.mxu0
      %v726 = vadd.f32 0.0, %v725
      %v727 = vpop.f32.mrf.mxu0
      %v728 = vadd.f32 0.0, %v727
      %729 = vmatmul.bf16.gmra.mxu0 %v645
      %v730 = vpop.f32.mrf.mxu0
      %v731 = vadd.f32 0.0, %v730
      %v732 = vpop.f32.mrf.mxu0
      %v733 = vadd.f32 0.0, %v732
      %734 = vmatmul.bf16.gmra.mxu0 %v648
      %v735 = vpop.f32.mrf.mxu0
      %v736 = vadd.f32 0.0, %v735
      %v737 = vpop.f32.mrf.mxu0
      %v738 = vadd.f32 0.0, %v737
      %739 = vmatmul.bf16.gmra.mxu0 %v651
      %v740 = vpop.f32.mrf.mxu0
      %v741 = vadd.f32 0.0, %v740
      %v742 = vpop.f32.mrf.mxu0
      %v743 = vadd.f32 0.0, %v742
      %744 = vdwg.mxu0
      %v745 = vadd.f32 %v477, %v666
      %v746 = vadd.f32 %v479, %v668
      %v747 = vadd.f32 %v482, %v671
      %v748 = vadd.f32 %v484, %v673
      %v749 = vadd.f32 %v487, %v676
      %v750 = vadd.f32 %v489, %v678
      %v751 = vadd.f32 %v492, %v681
      %v752 = vadd.f32 %v494, %v683
      %v753 = vadd.f32 %v497, %v686
      %v754 = vadd.f32 %v499, %v688
      %v755 = vadd.f32 %v502, %v691
      %v756 = vadd.f32 %v504, %v693
      %v757 = vadd.f32 %v507, %v696
      %v758 = vadd.f32 %v509, %v698
      %v759 = vadd.f32 %v512, %v701
      %v760 = vadd.f32 %v514, %v703
      %v761 = vadd.f32 %v517, %v706
      %v762 = vadd.f32 %v519, %v708
      %v763 = vadd.f32 %v522, %v711
      %v764 = vadd.f32 %v524, %v713
      %v765 = vadd.f32 %v527, %v716
      %v766 = vadd.f32 %v529, %v718
      %v767 = vadd.f32 %v532, %v721
      %v768 = vadd.f32 %v534, %v723
      %v769 = vadd.f32 %v537, %v726
      %v770 = vadd.f32 %v539, %v728
      %v771 = vadd.f32 %v542, %v731
      %v772 = vadd.f32 %v544, %v733
      %v773 = vadd.f32 %v547, %v736
      %v774 = vadd.f32 %v549, %v738
      %v775 = vadd.f32 %v552, %v741
      %v776 = vadd.f32 %v554, %v743
      %s777 = scalar_lea.vmem %s165, 24
      %v778 = vld [vmem:[%s777] sm:$0xff]
      %v779 = vld [vmem:[%s777 + $0x8] sm:$0xff]
      %v780 = vld [vmem:[%s777 + $0x18] sm:$0xff]
      %v781 = vld [vmem:[%s777 + $0x20] sm:$0xff]
      %v782 = vld [vmem:[%s777 + $0x30] sm:$0xff]
      %v783 = vld [vmem:[%s777 + $0x38] sm:$0xff]
      %v784 = vld [vmem:[%s777 + $0x48] sm:$0xff]
      %v785 = vld [vmem:[%s777 + $0x50] sm:$0xff]
      %v786 = vld [vmem:[%s777 + $0x60] sm:$0xff]
      %v787 = vld [vmem:[%s777 + $0x68] sm:$0xff]
      %v788 = vld [vmem:[%s777 + $0x78] sm:$0xff]
      %v789 = vld [vmem:[%s777 + $0x80] sm:$0xff]
      %v790 = vld [vmem:[%s777 + $0x90] sm:$0xff]
      %v791 = vld [vmem:[%s777 + $0x98] sm:$0xff]
      %v792 = vld [vmem:[%s777 + $0xa8] sm:$0xff]
      %v793 = vld [vmem:[%s777 + $0xb0] sm:$0xff]
      %v794 = vld [vmem:[%s777 + $0xc0] sm:$0xff]
      %v795 = vld [vmem:[%s777 + $0xc8] sm:$0xff]
      %v796 = vld [vmem:[%s777 + $0xd8] sm:$0xff]
      %v797 = vld [vmem:[%s777 + $0xe0] sm:$0xff]
      %v798 = vld [vmem:[%s777 + $0xf0] sm:$0xff]
      %v799 = vld [vmem:[%s777 + $0xf8] sm:$0xff]
      %v800 = vld [vmem:[%s777 + $0x108] sm:$0xff]
      %v801 = vld [vmem:[%s777 + $0x110] sm:$0xff]
      %v802 = vld [vmem:[%s777 + $0x120] sm:$0xff]
      %v803 = vld [vmem:[%s777 + $0x128] sm:$0xff]
      %v804 = vld [vmem:[%s777 + $0x138] sm:$0xff]
      %v805 = vld [vmem:[%s777 + $0x140] sm:$0xff]
      %v806 = vld [vmem:[%s777 + $0x150] sm:$0xff]
      %v807 = vld [vmem:[%s777 + $0x158] sm:$0xff]
      %v808 = vld [vmem:[%s777 + $0x168] sm:$0xff]
      %v809 = vld [vmem:[%s777 + $0x170] sm:$0xff]
      %v810 = vld [vmem:[%s1 + $0x4] sm:$0xc]
      %v811 = vpack.c.bf16 %v779, %v778
      %v812 = vpack.c.bf16 %v781, %v780
      %v813 = vpack.c.bf16 %v783, %v782
      %v814 = vpack.c.bf16 %v785, %v784
      %v815 = vpack.c.bf16 %v787, %v786
      %v816 = vpack.c.bf16 %v789, %v788
      %v817 = vpack.c.bf16 %v791, %v790
      %v818 = vpack.c.bf16 %v793, %v792
      %v819 = vpack.c.bf16 %v795, %v794
      %v820 = vpack.c.bf16 %v797, %v796
      %v821 = vpack.c.bf16 %v799, %v798
      %v822 = vpack.c.bf16 %v801, %v800
      %v823 = vpack.c.bf16 %v803, %v802
      %v824 = vpack.c.bf16 %v805, %v804
      %v825 = vpack.c.bf16 %v807, %v806
      %v826 = vpack.c.bf16 %v809, %v808
      %v828 = vunpack.c.l.b16 %v810
      %v829 = vpack.c.b16 %v828, %v828
      %v830 = vrot.slane %v829, 2
      %v832 = vsel %vm274, %v811, 0
      %v835 = vsel %vm274, %v812, 0
      %v838 = vsel %vm274, %v813, 0
      %v841 = vsel %vm274, %v814, 0
      %v844 = vsel %vm274, %v815, 0
      %v847 = vsel %vm274, %v816, 0
      %v850 = vsel %vm274, %v817, 0
      %v853 = vsel %vm274, %v818, 0
      %v856 = vsel %vm274, %v819, 0
      %v859 = vsel %vm274, %v820, 0
      %v862 = vsel %vm274, %v821, 0
      %v865 = vsel %vm274, %v822, 0
      %v868 = vsel %vm274, %v823, 0
      %v871 = vsel %vm274, %v824, 0
      %v874 = vsel %vm274, %v825, 0
      %v877 = vsel %vm274, %v826, 0
      %v880 = vsel %vm323, %v830, 0
      %882 = vmatpush.bf16.msra.mxu0 0
      %883 = vmatpush.bf16.msra.mxu0 0
      %884 = vmatpush.bf16.msra.mxu0 0
      %885 = vmatpush.bf16.msra.mxu0 0
      %886 = vmatpush.bf16.msra.mxu0 0
      %887 = vmatpush.bf16.msra.mxu0 0
      %888 = vmatpush.bf16.msra.mxu0 0
      %889 = vmatpush.bf16.msra.mxu0 %v880
      %890 = vmatmul.bf16.gmra.mxu0 %v832
      %v891 = vpop.f32.mrf.mxu0
      %v892 = vadd.f32 0.0, %v891
      %v893 = vpop.f32.mrf.mxu0
      %v894 = vadd.f32 0.0, %v893
      %895 = vmatmul.bf16.gmra.mxu0 %v835
      %v896 = vpop.f32.mrf.mxu0
      %v897 = vadd.f32 0.0, %v896
      %v898 = vpop.f32.mrf.mxu0
      %v899 = vadd.f32 0.0, %v898
      %900 = vmatmul.bf16.gmra.mxu0 %v838
      %v901 = vpop.f32.mrf.mxu0
      %v902 = vadd.f32 0.0, %v901
      %v903 = vpop.f32.mrf.mxu0
      %v904 = vadd.f32 0.0, %v903
      %905 = vmatmul.bf16.gmra.mxu0 %v841
      %v906 = vpop.f32.mrf.mxu0
      %v907 = vadd.f32 0.0, %v906
      %v908 = vpop.f32.mrf.mxu0
      %v909 = vadd.f32 0.0, %v908
      %910 = vmatmul.bf16.gmra.mxu0 %v844
      %v911 = vpop.f32.mrf.mxu0
      %v912 = vadd.f32 0.0, %v911
      %v913 = vpop.f32.mrf.mxu0
      %v914 = vadd.f32 0.0, %v913
      %915 = vmatmul.bf16.gmra.mxu0 %v847
      %v916 = vpop.f32.mrf.mxu0
      %v917 = vadd.f32 0.0, %v916
      %v918 = vpop.f32.mrf.mxu0
      %v919 = vadd.f32 0.0, %v918
      %920 = vmatmul.bf16.gmra.mxu0 %v850
      %v921 = vpop.f32.mrf.mxu0
      %v922 = vadd.f32 0.0, %v921
      %v923 = vpop.f32.mrf.mxu0
      %v924 = vadd.f32 0.0, %v923
      %925 = vmatmul.bf16.gmra.mxu0 %v853
      %v926 = vpop.f32.mrf.mxu0
      %v927 = vadd.f32 0.0, %v926
      %v928 = vpop.f32.mrf.mxu0
      %v929 = vadd.f32 0.0, %v928
      %930 = vmatmul.bf16.gmra.mxu0 %v856
      %v931 = vpop.f32.mrf.mxu0
      %v932 = vadd.f32 0.0, %v931
      %v933 = vpop.f32.mrf.mxu0
      %v934 = vadd.f32 0.0, %v933
      %935 = vmatmul.bf16.gmra.mxu0 %v859
      %v936 = vpop.f32.mrf.mxu0
      %v937 = vadd.f32 0.0, %v936
      %v938 = vpop.f32.mrf.mxu0
      %v939 = vadd.f32 0.0, %v938
      %940 = vmatmul.bf16.gmra.mxu0 %v862
      %v941 = vpop.f32.mrf.mxu0
      %v942 = vadd.f32 0.0, %v941
      %v943 = vpop.f32.mrf.mxu0
      %v944 = vadd.f32 0.0, %v943
      %945 = vmatmul.bf16.gmra.mxu0 %v865
      %v946 = vpop.f32.mrf.mxu0
      %v947 = vadd.f32 0.0, %v946
      %v948 = vpop.f32.mrf.mxu0
      %v949 = vadd.f32 0.0, %v948
      %950 = vmatmul.bf16.gmra.mxu0 %v868
      %v951 = vpop.f32.mrf.mxu0
      %v952 = vadd.f32 0.0, %v951
      %v953 = vpop.f32.mrf.mxu0
      %v954 = vadd.f32 0.0, %v953
      %955 = vmatmul.bf16.gmra.mxu0 %v871
      %v956 = vpop.f32.mrf.mxu0
      %v957 = vadd.f32 0.0, %v956
      %v958 = vpop.f32.mrf.mxu0
      %v959 = vadd.f32 0.0, %v958
      %960 = vmatmul.bf16.gmra.mxu0 %v874
      %v961 = vpop.f32.mrf.mxu0
      %v962 = vadd.f32 0.0, %v961
      %v963 = vpop.f32.mrf.mxu0
      %v964 = vadd.f32 0.0, %v963
      %965 = vmatmul.bf16.gmra.mxu0 %v877
      %v966 = vpop.f32.mrf.mxu0
      %v967 = vadd.f32 0.0, %v966
      %v968 = vpop.f32.mrf.mxu0
      %v969 = vadd.f32 0.0, %v968
      %970 = vdwg.mxu0
      %v971 = vadd.f32 %v745, %v892
      %v972 = vadd.f32 %v746, %v894
      %v973 = vadd.f32 %v747, %v897
      %v974 = vadd.f32 %v748, %v899
      %v975 = vadd.f32 %v749, %v902
      %v976 = vadd.f32 %v750, %v904
      %v977 = vadd.f32 %v751, %v907
      %v978 = vadd.f32 %v752, %v909
      %v979 = vadd.f32 %v753, %v912
      %v980 = vadd.f32 %v754, %v914
      %v981 = vadd.f32 %v755, %v917
      %v982 = vadd.f32 %v756, %v919
      %v983 = vadd.f32 %v757, %v922
      %v984 = vadd.f32 %v758, %v924
      %v985 = vadd.f32 %v759, %v927
      %v986 = vadd.f32 %v760, %v929
      %v987 = vadd.f32 %v761, %v932
      %v988 = vadd.f32 %v762, %v934
      %v989 = vadd.f32 %v763, %v937
      %v990 = vadd.f32 %v764, %v939
      %v991 = vadd.f32 %v765, %v942
      %v992 = vadd.f32 %v766, %v944
      %v993 = vadd.f32 %v767, %v947
      %v994 = vadd.f32 %v768, %v949
      %v995 = vadd.f32 %v769, %v952
      %v996 = vadd.f32 %v770, %v954
      %v997 = vadd.f32 %v771, %v957
      %v998 = vadd.f32 %v772, %v959
      %v999 = vadd.f32 %v773, %v962
      %v1000 = vadd.f32 %v774, %v964
      %v1001 = vadd.f32 %v775, %v967
      %v1002 = vadd.f32 %v776, %v969
      %v1003 = vld [vmem:[%s777 + $0x1] sm:$0xff]
      %v1004 = vld [vmem:[%s777 + $0x9] sm:$0xff]
      %v1005 = vld [vmem:[%s777 + $0x19] sm:$0xff]
      %v1006 = vld [vmem:[%s777 + $0x21] sm:$0xff]
      %v1007 = vld [vmem:[%s777 + $0x31] sm:$0xff]
      %v1008 = vld [vmem:[%s777 + $0x39] sm:$0xff]
      %v1009 = vld [vmem:[%s777 + $0x49] sm:$0xff]
      %v1010 = vld [vmem:[%s777 + $0x51] sm:$0xff]
      %v1011 = vld [vmem:[%s777 + $0x61] sm:$0xff]
      %v1012 = vld [vmem:[%s777 + $0x69] sm:$0xff]
      %v1013 = vld [vmem:[%s777 + $0x79] sm:$0xff]
      %v1014 = vld [vmem:[%s777 + $0x81] sm:$0xff]
      %v1015 = vld [vmem:[%s777 + $0x91] sm:$0xff]
      %v1016 = vld [vmem:[%s777 + $0x99] sm:$0xff]
      %v1017 = vld [vmem:[%s777 + $0xa9] sm:$0xff]
      %v1018 = vld [vmem:[%s777 + $0xb1] sm:$0xff]
      %v1019 = vld [vmem:[%s777 + $0xc1] sm:$0xff]
      %v1020 = vld [vmem:[%s777 + $0xc9] sm:$0xff]
      %v1021 = vld [vmem:[%s777 + $0xd9] sm:$0xff]
      %v1022 = vld [vmem:[%s777 + $0xe1] sm:$0xff]
      %v1023 = vld [vmem:[%s777 + $0xf1] sm:$0xff]
      %v1024 = vld [vmem:[%s777 + $0xf9] sm:$0xff]
      %v1025 = vld [vmem:[%s777 + $0x109] sm:$0xff]
      %v1026 = vld [vmem:[%s777 + $0x111] sm:$0xff]
      %v1027 = vld [vmem:[%s777 + $0x121] sm:$0xff]
      %v1028 = vld [vmem:[%s777 + $0x129] sm:$0xff]
      %v1029 = vld [vmem:[%s777 + $0x139] sm:$0xff]
      %v1030 = vld [vmem:[%s777 + $0x141] sm:$0xff]
      %v1031 = vld [vmem:[%s777 + $0x151] sm:$0xff]
      %v1032 = vld [vmem:[%s777 + $0x159] sm:$0xff]
      %v1033 = vld [vmem:[%s777 + $0x169] sm:$0xff]
      %v1034 = vld [vmem:[%s777 + $0x171] sm:$0xff]
      %v1035 = vld [vmem:[%s1 + $0x8] sm:$0x3]
      %v1036 = vpack.c.bf16 %v1004, %v1003
      %v1037 = vpack.c.bf16 %v1006, %v1005
      %v1038 = vpack.c.bf16 %v1008, %v1007
      %v1039 = vpack.c.bf16 %v1010, %v1009
      %v1040 = vpack.c.bf16 %v1012, %v1011
      %v1041 = vpack.c.bf16 %v1014, %v1013
      %v1042 = vpack.c.bf16 %v1016, %v1015
      %v1043 = vpack.c.bf16 %v1018, %v1017
      %v1044 = vpack.c.bf16 %v1020, %v1019
      %v1045 = vpack.c.bf16 %v1022, %v1021
      %v1046 = vpack.c.bf16 %v1024, %v1023
      %v1047 = vpack.c.bf16 %v1026, %v1025
      %v1048 = vpack.c.bf16 %v1028, %v1027
      %v1049 = vpack.c.bf16 %v1030, %v1029
      %v1050 = vpack.c.bf16 %v1032, %v1031
      %v1051 = vpack.c.bf16 %v1034, %v1033
      %v1053 = vsel %vm274, %v1036, 0
      %v1056 = vsel %vm274, %v1037, 0
      %v1059 = vsel %vm274, %v1038, 0
      %v1062 = vsel %vm274, %v1039, 0
      %v1065 = vsel %vm274, %v1040, 0
      %v1068 = vsel %vm274, %v1041, 0
      %v1071 = vsel %vm274, %v1042, 0
      %v1074 = vsel %vm274, %v1043, 0
      %v1077 = vsel %vm274, %v1044, 0
      %v1080 = vsel %vm274, %v1045, 0
      %v1083 = vsel %vm274, %v1046, 0
      %v1086 = vsel %vm274, %v1047, 0
      %v1089 = vsel %vm274, %v1048, 0
      %v1092 = vsel %vm274, %v1049, 0
      %v1095 = vsel %vm274, %v1050, 0
      %v1098 = vsel %vm274, %v1051, 0
      %v1101 = vsel %vm323, %v1035, 0
      %1103 = vmatpush.bf16.msra.mxu0 0
      %1104 = vmatpush.bf16.msra.mxu0 0
      %1105 = vmatpush.bf16.msra.mxu0 0
      %1106 = vmatpush.bf16.msra.mxu0 0
      %1107 = vmatpush.bf16.msra.mxu0 0
      %1108 = vmatpush.bf16.msra.mxu0 0
      %1109 = vmatpush.bf16.msra.mxu0 0
      %1110 = vmatpush.bf16.msra.mxu0 %v1101
      %1111 = vmatmul.bf16.gmra.mxu0 %v1053
      %v1112 = vpop.f32.mrf.mxu0
      %v1113 = vadd.f32 0.0, %v1112
      %v1114 = vpop.f32.mrf.mxu0
      %v1115 = vadd.f32 0.0, %v1114
      %1116 = vmatmul.bf16.gmra.mxu0 %v1056
      %v1117 = vpop.f32.mrf.mxu0
      %v1118 = vadd.f32 0.0, %v1117
      %v1119 = vpop.f32.mrf.mxu0
      %v1120 = vadd.f32 0.0, %v1119
      %1121 = vmatmul.bf16.gmra.mxu0 %v1059
      %v1122 = vpop.f32.mrf.mxu0
      %v1123 = vadd.f32 0.0, %v1122
      %v1124 = vpop.f32.mrf.mxu0
      %v1125 = vadd.f32 0.0, %v1124
      %1126 = vmatmul.bf16.gmra.mxu0 %v1062
      %v1127 = vpop.f32.mrf.mxu0
      %v1128 = vadd.f32 0.0, %v1127
      %v1129 = vpop.f32.mrf.mxu0
      %v1130 = vadd.f32 0.0, %v1129
      %1131 = vmatmul.bf16.gmra.mxu0 %v1065
      %v1132 = vpop.f32.mrf.mxu0
      %v1133 = vadd.f32 0.0, %v1132
      %v1134 = vpop.f32.mrf.mxu0
      %v1135 = vadd.f32 0.0, %v1134
      %1136 = vmatmul.bf16.gmra.mxu0 %v1068
      %v1137 = vpop.f32.mrf.mxu0
      %v1138 = vadd.f32 0.0, %v1137
      %v1139 = vpop.f32.mrf.mxu0
      %v1140 = vadd.f32 0.0, %v1139
      %1141 = vmatmul.bf16.gmra.mxu0 %v1071
      %v1142 = vpop.f32.mrf.mxu0
      %v1143 = vadd.f32 0.0, %v1142
      %v1144 = vpop.f32.mrf.mxu0
      %v1145 = vadd.f32 0.0, %v1144
      %1146 = vmatmul.bf16.gmra.mxu0 %v1074
      %v1147 = vpop.f32.mrf.mxu0
      %v1148 = vadd.f32 0.0, %v1147
      %v1149 = vpop.f32.mrf.mxu0
      %v1150 = vadd.f32 0.0, %v1149
      %1151 = vmatmul.bf16.gmra.mxu0 %v1077
      %v1152 = vpop.f32.mrf.mxu0
      %v1153 = vadd.f32 0.0, %v1152
      %v1154 = vpop.f32.mrf.mxu0
      %v1155 = vadd.f32 0.0, %v1154
      %1156 = vmatmul.bf16.gmra.mxu0 %v1080
      %v1157 = vpop.f32.mrf.mxu0
      %v1158 = vadd.f32 0.0, %v1157
      %v1159 = vpop.f32.mrf.mxu0
      %v1160 = vadd.f32 0.0, %v1159
      %1161 = vmatmul.bf16.gmra.mxu0 %v1083
      %v1162 = vpop.f32.mrf.mxu0
      %v1163 = vadd.f32 0.0, %v1162
      %v1164 = vpop.f32.mrf.mxu0
      %v1165 = vadd.f32 0.0, %v1164
      %1166 = vmatmul.bf16.gmra.mxu0 %v1086
      %v1167 = vpop.f32.mrf.mxu0
      %v1168 = vadd.f32 0.0, %v1167
      %v1169 = vpop.f32.mrf.mxu0
      %v1170 = vadd.f32 0.0, %v1169
      %1171 = vmatmul.bf16.gmra.mxu0 %v1089
      %v1172 = vpop.f32.mrf.mxu0
      %v1173 = vadd.f32 0.0, %v1172
      %v1174 = vpop.f32.mrf.mxu0
      %v1175 = vadd.f32 0.0, %v1174
      %1176 = vmatmul.bf16.gmra.mxu0 %v1092
      %v1177 = vpop.f32.mrf.mxu0
      %v1178 = vadd.f32 0.0, %v1177
      %v1179 = vpop.f32.mrf.mxu0
      %v1180 = vadd.f32 0.0, %v1179
      %1181 = vmatmul.bf16.gmra.mxu0 %v1095
      %v1182 = vpop.f32.mrf.mxu0
      %v1183 = vadd.f32 0.0, %v1182
      %v1184 = vpop.f32.mrf.mxu0
      %v1185 = vadd.f32 0.0, %v1184
      %1186 = vmatmul.bf16.gmra.mxu0 %v1098
      %v1187 = vpop.f32.mrf.mxu0
      %v1188 = vadd.f32 0.0, %v1187
      %v1189 = vpop.f32.mrf.mxu0
      %v1190 = vadd.f32 0.0, %v1189
      %1191 = vdwg.mxu0
      %v1192 = vadd.f32 %v971, %v1113
      %v1193 = vadd.f32 %v972, %v1115
      %v1194 = vadd.f32 %v973, %v1118
      %v1195 = vadd.f32 %v974, %v1120
      %v1196 = vadd.f32 %v975, %v1123
      %v1197 = vadd.f32 %v976, %v1125
      %v1198 = vadd.f32 %v977, %v1128
      %v1199 = vadd.f32 %v978, %v1130
      %v1200 = vadd.f32 %v979, %v1133
      %v1201 = vadd.f32 %v980, %v1135
      %v1202 = vadd.f32 %v981, %v1138
      %v1203 = vadd.f32 %v982, %v1140
      %v1204 = vadd.f32 %v983, %v1143
      %v1205 = vadd.f32 %v984, %v1145
      %v1206 = vadd.f32 %v985, %v1148
      %v1207 = vadd.f32 %v986, %v1150
      %v1208 = vadd.f32 %v987, %v1153
      %v1209 = vadd.f32 %v988, %v1155
      %v1210 = vadd.f32 %v989, %v1158
      %v1211 = vadd.f32 %v990, %v1160
      %v1212 = vadd.f32 %v991, %v1163
      %v1213 = vadd.f32 %v992, %v1165
      %v1214 = vadd.f32 %v993, %v1168
      %v1215 = vadd.f32 %v994, %v1170
      %v1216 = vadd.f32 %v995, %v1173
      %v1217 = vadd.f32 %v996, %v1175
      %v1218 = vadd.f32 %v997, %v1178
      %v1219 = vadd.f32 %v998, %v1180
      %v1220 = vadd.f32 %v999, %v1183
      %v1221 = vadd.f32 %v1000, %v1185
      %v1222 = vadd.f32 %v1001, %v1188
      %v1223 = vadd.f32 %v1002, %v1190
      %v1224 = vld [vmem:[%s777 + $0x2] sm:$0xff]
      %v1225 = vld [vmem:[%s777 + $0xa] sm:$0xff]
      %v1226 = vld [vmem:[%s777 + $0x1a] sm:$0xff]
      %v1227 = vld [vmem:[%s777 + $0x22] sm:$0xff]
      %v1228 = vld [vmem:[%s777 + $0x32] sm:$0xff]
      %v1229 = vld [vmem:[%s777 + $0x3a] sm:$0xff]
      %v1230 = vld [vmem:[%s777 + $0x4a] sm:$0xff]
      %v1231 = vld [vmem:[%s777 + $0x52] sm:$0xff]
      %v1232 = vld [vmem:[%s777 + $0x62] sm:$0xff]
      %v1233 = vld [vmem:[%s777 + $0x6a] sm:$0xff]
      %v1234 = vld [vmem:[%s777 + $0x7a] sm:$0xff]
      %v1235 = vld [vmem:[%s777 + $0x82] sm:$0xff]
      %v1236 = vld [vmem:[%s777 + $0x92] sm:$0xff]
      %v1237 = vld [vmem:[%s777 + $0x9a] sm:$0xff]
      %v1238 = vld [vmem:[%s777 + $0xaa] sm:$0xff]
      %v1239 = vld [vmem:[%s777 + $0xb2] sm:$0xff]
      %v1240 = vld [vmem:[%s777 + $0xc2] sm:$0xff]
      %v1241 = vld [vmem:[%s777 + $0xca] sm:$0xff]
      %v1242 = vld [vmem:[%s777 + $0xda] sm:$0xff]
      %v1243 = vld [vmem:[%s777 + $0xe2] sm:$0xff]
      %v1244 = vld [vmem:[%s777 + $0xf2] sm:$0xff]
      %v1245 = vld [vmem:[%s777 + $0xfa] sm:$0xff]
      %v1246 = vld [vmem:[%s777 + $0x10a] sm:$0xff]
      %v1247 = vld [vmem:[%s777 + $0x112] sm:$0xff]
      %v1248 = vld [vmem:[%s777 + $0x122] sm:$0xff]
      %v1249 = vld [vmem:[%s777 + $0x12a] sm:$0xff]
      %v1250 = vld [vmem:[%s777 + $0x13a] sm:$0xff]
      %v1251 = vld [vmem:[%s777 + $0x142] sm:$0xff]
      %v1252 = vld [vmem:[%s777 + $0x152] sm:$0xff]
      %v1253 = vld [vmem:[%s777 + $0x15a] sm:$0xff]
      %v1254 = vld [vmem:[%s777 + $0x16a] sm:$0xff]
      %v1255 = vld [vmem:[%s777 + $0x172] sm:$0xff]
      %v1256 = vld [vmem:[%s1 + $0x8] sm:$0xc]
      %v1257 = vpack.c.bf16 %v1225, %v1224
      %v1258 = vpack.c.bf16 %v1227, %v1226
      %v1259 = vpack.c.bf16 %v1229, %v1228
      %v1260 = vpack.c.bf16 %v1231, %v1230
      %v1261 = vpack.c.bf16 %v1233, %v1232
      %v1262 = vpack.c.bf16 %v1235, %v1234
      %v1263 = vpack.c.bf16 %v1237, %v1236
      %v1264 = vpack.c.bf16 %v1239, %v1238
      %v1265 = vpack.c.bf16 %v1241, %v1240
      %v1266 = vpack.c.bf16 %v1243, %v1242
      %v1267 = vpack.c.bf16 %v1245, %v1244
      %v1268 = vpack.c.bf16 %v1247, %v1246
      %v1269 = vpack.c.bf16 %v1249, %v1248
      %v1270 = vpack.c.bf16 %v1251, %v1250
      %v1271 = vpack.c.bf16 %v1253, %v1252
      %v1272 = vpack.c.bf16 %v1255, %v1254
      %v1274 = vunpack.c.l.b16 %v1256
      %v1275 = vpack.c.b16 %v1274, %v1274
      %v1276 = vrot.slane %v1275, 2
      %v1278 = vsel %vm274, %v1257, 0
      %v1281 = vsel %vm274, %v1258, 0
      %v1284 = vsel %vm274, %v1259, 0
      %v1287 = vsel %vm274, %v1260, 0
      %v1290 = vsel %vm274, %v1261, 0
      %v1293 = vsel %vm274, %v1262, 0
      %v1296 = vsel %vm274, %v1263, 0
      %v1299 = vsel %vm274, %v1264, 0
      %v1302 = vsel %vm274, %v1265, 0
      %v1305 = vsel %vm274, %v1266, 0
      %v1308 = vsel %vm274, %v1267, 0
      %v1311 = vsel %vm274, %v1268, 0
      %v1314 = vsel %vm274, %v1269, 0
      %v1317 = vsel %vm274, %v1270, 0
      %v1320 = vsel %vm274, %v1271, 0
      %v1323 = vsel %vm274, %v1272, 0
      %v1326 = vsel %vm323, %v1276, 0
      %1328 = vmatpush.bf16.msra.mxu0 0
      %1329 = vmatpush.bf16.msra.mxu0 0
      %1330 = vmatpush.bf16.msra.mxu0 0
      %1331 = vmatpush.bf16.msra.mxu0 0
      %1332 = vmatpush.bf16.msra.mxu0 0
      %1333 = vmatpush.bf16.msra.mxu0 0
      %1334 = vmatpush.bf16.msra.mxu0 0
      %1335 = vmatpush.bf16.msra.mxu0 %v1326
      %1336 = vmatmul.bf16.gmra.mxu0 %v1278
      %v1337 = vpop.f32.mrf.mxu0
      %v1338 = vadd.f32 0.0, %v1337
      %v1339 = vpop.f32.mrf.mxu0
      %v1340 = vadd.f32 0.0, %v1339
      %1341 = vmatmul.bf16.gmra.mxu0 %v1281
      %v1342 = vpop.f32.mrf.mxu0
      %v1343 = vadd.f32 0.0, %v1342
      %v1344 = vpop.f32.mrf.mxu0
      %v1345 = vadd.f32 0.0, %v1344
      %1346 = vmatmul.bf16.gmra.mxu0 %v1284
      %v1347 = vpop.f32.mrf.mxu0
      %v1348 = vadd.f32 0.0, %v1347
      %v1349 = vpop.f32.mrf.mxu0
      %v1350 = vadd.f32 0.0, %v1349
      %1351 = vmatmul.bf16.gmra.mxu0 %v1287
      %v1352 = vpop.f32.mrf.mxu0
      %v1353 = vadd.f32 0.0, %v1352
      %v1354 = vpop.f32.mrf.mxu0
      %v1355 = vadd.f32 0.0, %v1354
      %1356 = vmatmul.bf16.gmra.mxu0 %v1290
      %v1357 = vpop.f32.mrf.mxu0
      %v1358 = vadd.f32 0.0, %v1357
      %v1359 = vpop.f32.mrf.mxu0
      %v1360 = vadd.f32 0.0, %v1359
      %1361 = vmatmul.bf16.gmra.mxu0 %v1293
      %v1362 = vpop.f32.mrf.mxu0
      %v1363 = vadd.f32 0.0, %v1362
      %v1364 = vpop.f32.mrf.mxu0
      %v1365 = vadd.f32 0.0, %v1364
      %1366 = vmatmul.bf16.gmra.mxu0 %v1296
      %v1367 = vpop.f32.mrf.mxu0
      %v1368 = vadd.f32 0.0, %v1367
      %v1369 = vpop.f32.mrf.mxu0
      %v1370 = vadd.f32 0.0, %v1369
      %1371 = vmatmul.bf16.gmra.mxu0 %v1299
      %v1372 = vpop.f32.mrf.mxu0
      %v1373 = vadd.f32 0.0, %v1372
      %v1374 = vpop.f32.mrf.mxu0
      %v1375 = vadd.f32 0.0, %v1374
      %1376 = vmatmul.bf16.gmra.mxu0 %v1302
      %v1377 = vpop.f32.mrf.mxu0
      %v1378 = vadd.f32 0.0, %v1377
      %v1379 = vpop.f32.mrf.mxu0
      %v1380 = vadd.f32 0.0, %v1379
      %1381 = vmatmul.bf16.gmra.mxu0 %v1305
      %v1382 = vpop.f32.mrf.mxu0
      %v1383 = vadd.f32 0.0, %v1382
      %v1384 = vpop.f32.mrf.mxu0
      %v1385 = vadd.f32 0.0, %v1384
      %1386 = vmatmul.bf16.gmra.mxu0 %v1308
      %v1387 = vpop.f32.mrf.mxu0
      %v1388 = vadd.f32 0.0, %v1387
      %v1389 = vpop.f32.mrf.mxu0
      %v1390 = vadd.f32 0.0, %v1389
      %1391 = vmatmul.bf16.gmra.mxu0 %v1311
      %v1392 = vpop.f32.mrf.mxu0
      %v1393 = vadd.f32 0.0, %v1392
      %v1394 = vpop.f32.mrf.mxu0
      %v1395 = vadd.f32 0.0, %v1394
      %1396 = vmatmul.bf16.gmra.mxu0 %v1314
      %v1397 = vpop.f32.mrf.mxu0
      %v1398 = vadd.f32 0.0, %v1397
      %v1399 = vpop.f32.mrf.mxu0
      %v1400 = vadd.f32 0.0, %v1399
      %1401 = vmatmul.bf16.gmra.mxu0 %v1317
      %v1402 = vpop.f32.mrf.mxu0
      %v1403 = vadd.f32 0.0, %v1402
      %v1404 = vpop.f32.mrf.mxu0
      %v1405 = vadd.f32 0.0, %v1404
      %1406 = vmatmul.bf16.gmra.mxu0 %v1320
      %v1407 = vpop.f32.mrf.mxu0
      %v1408 = vadd.f32 0.0, %v1407
      %v1409 = vpop.f32.mrf.mxu0
      %v1410 = vadd.f32 0.0, %v1409
      %1411 = vmatmul.bf16.gmra.mxu0 %v1323
      %v1412 = vpop.f32.mrf.mxu0
      %v1413 = vadd.f32 0.0, %v1412
      %v1414 = vpop.f32.mrf.mxu0
      %v1415 = vadd.f32 0.0, %v1414
      %1416 = vdwg.mxu0
      %v1417 = vadd.f32 %v1192, %v1338
      %v1418 = vadd.f32 %v1193, %v1340
      %v1419 = vadd.f32 %v1194, %v1343
      %v1420 = vadd.f32 %v1195, %v1345
      %v1421 = vadd.f32 %v1196, %v1348
      %v1422 = vadd.f32 %v1197, %v1350
      %v1423 = vadd.f32 %v1198, %v1353
      %v1424 = vadd.f32 %v1199, %v1355
      %v1425 = vadd.f32 %v1200, %v1358
      %v1426 = vadd.f32 %v1201, %v1360
      %v1427 = vadd.f32 %v1202, %v1363
      %v1428 = vadd.f32 %v1203, %v1365
      %v1429 = vadd.f32 %v1204, %v1368
      %v1430 = vadd.f32 %v1205, %v1370
      %v1431 = vadd.f32 %v1206, %v1373
      %v1432 = vadd.f32 %v1207, %v1375
      %v1433 = vadd.f32 %v1208, %v1378
      %v1434 = vadd.f32 %v1209, %v1380
      %v1435 = vadd.f32 %v1210, %v1383
      %v1436 = vadd.f32 %v1211, %v1385
      %v1437 = vadd.f32 %v1212, %v1388
      %v1438 = vadd.f32 %v1213, %v1390
      %v1439 = vadd.f32 %v1214, %v1393
      %v1440 = vadd.f32 %v1215, %v1395
      %v1441 = vadd.f32 %v1216, %v1398
      %v1442 = vadd.f32 %v1217, %v1400
      %v1443 = vadd.f32 %v1218, %v1403
      %v1444 = vadd.f32 %v1219, %v1405
      %v1445 = vadd.f32 %v1220, %v1408
      %v1446 = vadd.f32 %v1221, %v1410
      %v1447 = vadd.f32 %v1222, %v1413
      %v1448 = vadd.f32 %v1223, %v1415
      %s1449 = scalar_lea.vmem %s165, 48
      %v1450 = vld [vmem:[%s1449] sm:$0xff]
      %v1451 = vld [vmem:[%s1449 + $0x8] sm:$0xff]
      %v1452 = vld [vmem:[%s1449 + $0x18] sm:$0xff]
      %v1453 = vld [vmem:[%s1449 + $0x20] sm:$0xff]
      %v1454 = vld [vmem:[%s1449 + $0x30] sm:$0xff]
      %v1455 = vld [vmem:[%s1449 + $0x38] sm:$0xff]
      %v1456 = vld [vmem:[%s1449 + $0x48] sm:$0xff]
      %v1457 = vld [vmem:[%s1449 + $0x50] sm:$0xff]
      %v1458 = vld [vmem:[%s1449 + $0x60] sm:$0xff]
      %v1459 = vld [vmem:[%s1449 + $0x68] sm:$0xff]
      %v1460 = vld [vmem:[%s1449 + $0x78] sm:$0xff]
      %v1461 = vld [vmem:[%s1449 + $0x80] sm:$0xff]
      %v1462 = vld [vmem:[%s1449 + $0x90] sm:$0xff]
      %v1463 = vld [vmem:[%s1449 + $0x98] sm:$0xff]
      %v1464 = vld [vmem:[%s1449 + $0xa8] sm:$0xff]
      %v1465 = vld [vmem:[%s1449 + $0xb0] sm:$0xff]
      %v1466 = vld [vmem:[%s1449 + $0xc0] sm:$0xff]
      %v1467 = vld [vmem:[%s1449 + $0xc8] sm:$0xff]
      %v1468 = vld [vmem:[%s1449 + $0xd8] sm:$0xff]
      %v1469 = vld [vmem:[%s1449 + $0xe0] sm:$0xff]
      %v1470 = vld [vmem:[%s1449 + $0xf0] sm:$0xff]
      %v1471 = vld [vmem:[%s1449 + $0xf8] sm:$0xff]
      %v1472 = vld [vmem:[%s1449 + $0x108] sm:$0xff]
      %v1473 = vld [vmem:[%s1449 + $0x110] sm:$0xff]
      %v1474 = vld [vmem:[%s1449 + $0x120] sm:$0xff]
      %v1475 = vld [vmem:[%s1449 + $0x128] sm:$0xff]
      %v1476 = vld [vmem:[%s1449 + $0x138] sm:$0xff]
      %v1477 = vld [vmem:[%s1449 + $0x140] sm:$0xff]
      %v1478 = vld [vmem:[%s1449 + $0x150] sm:$0xff]
      %v1479 = vld [vmem:[%s1449 + $0x158] sm:$0xff]
      %v1480 = vld [vmem:[%s1449 + $0x168] sm:$0xff]
      %v1481 = vld [vmem:[%s1449 + $0x170] sm:$0xff]
      %v1482 = vld [vmem:[%s1 + $0xc] sm:$0x3]
      %v1483 = vpack.c.bf16 %v1451, %v1450
      %v1484 = vpack.c.bf16 %v1453, %v1452
      %v1485 = vpack.c.bf16 %v1455, %v1454
      %v1486 = vpack.c.bf16 %v1457, %v1456
      %v1487 = vpack.c.bf16 %v1459, %v1458
      %v1488 = vpack.c.bf16 %v1461, %v1460
      %v1489 = vpack.c.bf16 %v1463, %v1462
      %v1490 = vpack.c.bf16 %v1465, %v1464
      %v1491 = vpack.c.bf16 %v1467, %v1466
      %v1492 = vpack.c.bf16 %v1469, %v1468
      %v1493 = vpack.c.bf16 %v1471, %v1470
      %v1494 = vpack.c.bf16 %v1473, %v1472
      %v1495 = vpack.c.bf16 %v1475, %v1474
      %v1496 = vpack.c.bf16 %v1477, %v1476
      %v1497 = vpack.c.bf16 %v1479, %v1478
      %v1498 = vpack.c.bf16 %v1481, %v1480
      %v1500 = vsel %vm274, %v1483, 0
      %v1503 = vsel %vm274, %v1484, 0
      %v1506 = vsel %vm274, %v1485, 0
      %v1509 = vsel %vm274, %v1486, 0
      %v1512 = vsel %vm274, %v1487, 0
      %v1515 = vsel %vm274, %v1488, 0
      %v1518 = vsel %vm274, %v1489, 0
      %v1521 = vsel %vm274, %v1490, 0
      %v1524 = vsel %vm274, %v1491, 0
      %v1527 = vsel %vm274, %v1492, 0
      %v1530 = vsel %vm274, %v1493, 0
      %v1533 = vsel %vm274, %v1494, 0
      %v1536 = vsel %vm274, %v1495, 0
      %v1539 = vsel %vm274, %v1496, 0
      %v1542 = vsel %vm274, %v1497, 0
      %v1545 = vsel %vm274, %v1498, 0
      %v1548 = vsel %vm323, %v1482, 0
      %1550 = vmatpush.bf16.msra.mxu0 0
      %1551 = vmatpush.bf16.msra.mxu0 0
      %1552 = vmatpush.bf16.msra.mxu0 0
      %1553 = vmatpush.bf16.msra.mxu0 0
      %1554 = vmatpush.bf16.msra.mxu0 0
      %1555 = vmatpush.bf16.msra.mxu0 0
      %1556 = vmatpush.bf16.msra.mxu0 0
      %1557 = vmatpush.bf16.msra.mxu0 %v1548
      %1558 = vmatmul.bf16.gmra.mxu0 %v1500
      %v1559 = vpop.f32.mrf.mxu0
      %v1560 = vadd.f32 0.0, %v1559
      %v1561 = vpop.f32.mrf.mxu0
      %v1562 = vadd.f32 0.0, %v1561
      %1563 = vmatmul.bf16.gmra.mxu0 %v1503
      %v1564 = vpop.f32.mrf.mxu0
      %v1565 = vadd.f32 0.0, %v1564
      %v1566 = vpop.f32.mrf.mxu0
      %v1567 = vadd.f32 0.0, %v1566
      %1568 = vmatmul.bf16.gmra.mxu0 %v1506
      %v1569 = vpop.f32.mrf.mxu0
      %v1570 = vadd.f32 0.0, %v1569
      %v1571 = vpop.f32.mrf.mxu0
      %v1572 = vadd.f32 0.0, %v1571
      %1573 = vmatmul.bf16.gmra.mxu0 %v1509
      %v1574 = vpop.f32.mrf.mxu0
      %v1575 = vadd.f32 0.0, %v1574
      %v1576 = vpop.f32.mrf.mxu0
      %v1577 = vadd.f32 0.0, %v1576
      %1578 = vmatmul.bf16.gmra.mxu0 %v1512
      %v1579 = vpop.f32.mrf.mxu0
      %v1580 = vadd.f32 0.0, %v1579
      %v1581 = vpop.f32.mrf.mxu0
      %v1582 = vadd.f32 0.0, %v1581
      %1583 = vmatmul.bf16.gmra.mxu0 %v1515
      %v1584 = vpop.f32.mrf.mxu0
      %v1585 = vadd.f32 0.0, %v1584
      %v1586 = vpop.f32.mrf.mxu0
      %v1587 = vadd.f32 0.0, %v1586
      %1588 = vmatmul.bf16.gmra.mxu0 %v1518
      %v1589 = vpop.f32.mrf.mxu0
      %v1590 = vadd.f32 0.0, %v1589
      %v1591 = vpop.f32.mrf.mxu0
      %v1592 = vadd.f32 0.0, %v1591
      %1593 = vmatmul.bf16.gmra.mxu0 %v1521
      %v1594 = vpop.f32.mrf.mxu0
      %v1595 = vadd.f32 0.0, %v1594
      %v1596 = vpop.f32.mrf.mxu0
      %v1597 = vadd.f32 0.0, %v1596
      %1598 = vmatmul.bf16.gmra.mxu0 %v1524
      %v1599 = vpop.f32.mrf.mxu0
      %v1600 = vadd.f32 0.0, %v1599
      %v1601 = vpop.f32.mrf.mxu0
      %v1602 = vadd.f32 0.0, %v1601
      %1603 = vmatmul.bf16.gmra.mxu0 %v1527
      %v1604 = vpop.f32.mrf.mxu0
      %v1605 = vadd.f32 0.0, %v1604
      %v1606 = vpop.f32.mrf.mxu0
      %v1607 = vadd.f32 0.0, %v1606
      %1608 = vmatmul.bf16.gmra.mxu0 %v1530
      %v1609 = vpop.f32.mrf.mxu0
      %v1610 = vadd.f32 0.0, %v1609
      %v1611 = vpop.f32.mrf.mxu0
      %v1612 = vadd.f32 0.0, %v1611
      %1613 = vmatmul.bf16.gmra.mxu0 %v1533
      %v1614 = vpop.f32.mrf.mxu0
      %v1615 = vadd.f32 0.0, %v1614
      %v1616 = vpop.f32.mrf.mxu0
      %v1617 = vadd.f32 0.0, %v1616
      %1618 = vmatmul.bf16.gmra.mxu0 %v1536
      %v1619 = vpop.f32.mrf.mxu0
      %v1620 = vadd.f32 0.0, %v1619
      %v1621 = vpop.f32.mrf.mxu0
      %v1622 = vadd.f32 0.0, %v1621
      %1623 = vmatmul.bf16.gmra.mxu0 %v1539
      %v1624 = vpop.f32.mrf.mxu0
      %v1625 = vadd.f32 0.0, %v1624
      %v1626 = vpop.f32.mrf.mxu0
      %v1627 = vadd.f32 0.0, %v1626
      %1628 = vmatmul.bf16.gmra.mxu0 %v1542
      %v1629 = vpop.f32.mrf.mxu0
      %v1630 = vadd.f32 0.0, %v1629
      %v1631 = vpop.f32.mrf.mxu0
      %v1632 = vadd.f32 0.0, %v1631
      %1633 = vmatmul.bf16.gmra.mxu0 %v1545
      %v1634 = vpop.f32.mrf.mxu0
      %v1635 = vadd.f32 0.0, %v1634
      %v1636 = vpop.f32.mrf.mxu0
      %v1637 = vadd.f32 0.0, %v1636
      %1638 = vdwg.mxu0
      %v1639 = vadd.f32 %v1417, %v1560
      %v1640 = vadd.f32 %v1418, %v1562
      %v1641 = vadd.f32 %v1419, %v1565
      %v1642 = vadd.f32 %v1420, %v1567
      %v1643 = vadd.f32 %v1421, %v1570
      %v1644 = vadd.f32 %v1422, %v1572
      %v1645 = vadd.f32 %v1423, %v1575
      %v1646 = vadd.f32 %v1424, %v1577
      %v1647 = vadd.f32 %v1425, %v1580
      %v1648 = vadd.f32 %v1426, %v1582
      %v1649 = vadd.f32 %v1427, %v1585
      %v1650 = vadd.f32 %v1428, %v1587
      %v1651 = vadd.f32 %v1429, %v1590
      %v1652 = vadd.f32 %v1430, %v1592
      %v1653 = vadd.f32 %v1431, %v1595
      %v1654 = vadd.f32 %v1432, %v1597
      %v1655 = vadd.f32 %v1433, %v1600
      %v1656 = vadd.f32 %v1434, %v1602
      %v1657 = vadd.f32 %v1435, %v1605
      %v1658 = vadd.f32 %v1436, %v1607
      %v1659 = vadd.f32 %v1437, %v1610
      %v1660 = vadd.f32 %v1438, %v1612
      %v1661 = vadd.f32 %v1439, %v1615
      %v1662 = vadd.f32 %v1440, %v1617
      %v1663 = vadd.f32 %v1441, %v1620
      %v1664 = vadd.f32 %v1442, %v1622
      %v1665 = vadd.f32 %v1443, %v1625
      %v1666 = vadd.f32 %v1444, %v1627
      %v1667 = vadd.f32 %v1445, %v1630
      %v1668 = vadd.f32 %v1446, %v1632
      %v1669 = vadd.f32 %v1447, %v1635
      %v1670 = vadd.f32 %v1448, %v1637
      %v1671 = vld [vmem:[%s1449 + $0x1] sm:$0xff]
      %v1672 = vld [vmem:[%s1449 + $0x9] sm:$0xff]
      %v1673 = vld [vmem:[%s1449 + $0x19] sm:$0xff]
      %v1674 = vld [vmem:[%s1449 + $0x21] sm:$0xff]
      %v1675 = vld [vmem:[%s1449 + $0x31] sm:$0xff]
      %v1676 = vld [vmem:[%s1449 + $0x39] sm:$0xff]
      %v1677 = vld [vmem:[%s1449 + $0x49] sm:$0xff]
      %v1678 = vld [vmem:[%s1449 + $0x51] sm:$0xff]
      %v1679 = vld [vmem:[%s1449 + $0x61] sm:$0xff]
      %v1680 = vld [vmem:[%s1449 + $0x69] sm:$0xff]
      %v1681 = vld [vmem:[%s1449 + $0x79] sm:$0xff]
      %v1682 = vld [vmem:[%s1449 + $0x81] sm:$0xff]
      %v1683 = vld [vmem:[%s1449 + $0x91] sm:$0xff]
      %v1684 = vld [vmem:[%s1449 + $0x99] sm:$0xff]
      %v1685 = vld [vmem:[%s1449 + $0xa9] sm:$0xff]
      %v1686 = vld [vmem:[%s1449 + $0xb1] sm:$0xff]
      %v1687 = vld [vmem:[%s1449 + $0xc1] sm:$0xff]
      %v1688 = vld [vmem:[%s1449 + $0xc9] sm:$0xff]
      %v1689 = vld [vmem:[%s1449 + $0xd9] sm:$0xff]
      %v1690 = vld [vmem:[%s1449 + $0xe1] sm:$0xff]
      %v1691 = vld [vmem:[%s1449 + $0xf1] sm:$0xff]
      %v1692 = vld [vmem:[%s1449 + $0xf9] sm:$0xff]
      %v1693 = vld [vmem:[%s1449 + $0x109] sm:$0xff]
      %v1694 = vld [vmem:[%s1449 + $0x111] sm:$0xff]
      %v1695 = vld [vmem:[%s1449 + $0x121] sm:$0xff]
      %v1696 = vld [vmem:[%s1449 + $0x129] sm:$0xff]
      %v1697 = vld [vmem:[%s1449 + $0x139] sm:$0xff]
      %v1698 = vld [vmem:[%s1449 + $0x141] sm:$0xff]
      %v1699 = vld [vmem:[%s1449 + $0x151] sm:$0xff]
      %v1700 = vld [vmem:[%s1449 + $0x159] sm:$0xff]
      %v1701 = vld [vmem:[%s1449 + $0x169] sm:$0xff]
      %v1702 = vld [vmem:[%s1449 + $0x171] sm:$0xff]
      %v1703 = vld [vmem:[%s1 + $0xc] sm:$0xc]
      %v1704 = vpack.c.bf16 %v1672, %v1671
      %v1705 = vpack.c.bf16 %v1674, %v1673
      %v1706 = vpack.c.bf16 %v1676, %v1675
      %v1707 = vpack.c.bf16 %v1678, %v1677
      %v1708 = vpack.c.bf16 %v1680, %v1679
      %v1709 = vpack.c.bf16 %v1682, %v1681
      %v1710 = vpack.c.bf16 %v1684, %v1683
      %v1711 = vpack.c.bf16 %v1686, %v1685
      %v1712 = vpack.c.bf16 %v1688, %v1687
      %v1713 = vpack.c.bf16 %v1690, %v1689
      %v1714 = vpack.c.bf16 %v1692, %v1691
      %v1715 = vpack.c.bf16 %v1694, %v1693
      %v1716 = vpack.c.bf16 %v1696, %v1695
      %v1717 = vpack.c.bf16 %v1698, %v1697
      %v1718 = vpack.c.bf16 %v1700, %v1699
      %v1719 = vpack.c.bf16 %v1702, %v1701
      %v1721 = vunpack.c.l.b16 %v1703
      %v1722 = vpack.c.b16 %v1721, %v1721
      %v1723 = vrot.slane %v1722, 2
      %v1725 = vsel %vm274, %v1704, 0
      %v1728 = vsel %vm274, %v1705, 0
      %v1731 = vsel %vm274, %v1706, 0
      %v1734 = vsel %vm274, %v1707, 0
      %v1737 = vsel %vm274, %v1708, 0
      %v1740 = vsel %vm274, %v1709, 0
      %v1743 = vsel %vm274, %v1710, 0
      %v1746 = vsel %vm274, %v1711, 0
      %v1749 = vsel %vm274, %v1712, 0
      %v1752 = vsel %vm274, %v1713, 0
      %v1755 = vsel %vm274, %v1714, 0
      %v1758 = vsel %vm274, %v1715, 0
      %v1761 = vsel %vm274, %v1716, 0
      %v1764 = vsel %vm274, %v1717, 0
      %v1767 = vsel %vm274, %v1718, 0
      %v1770 = vsel %vm274, %v1719, 0
      %v1773 = vsel %vm323, %v1723, 0
      %1775 = vmatpush.bf16.msra.mxu0 0
      %1776 = vmatpush.bf16.msra.mxu0 0
      %1777 = vmatpush.bf16.msra.mxu0 0
      %1778 = vmatpush.bf16.msra.mxu0 0
      %1779 = vmatpush.bf16.msra.mxu0 0
      %1780 = vmatpush.bf16.msra.mxu0 0
      %1781 = vmatpush.bf16.msra.mxu0 0
      %1782 = vmatpush.bf16.msra.mxu0 %v1773
      %1783 = vmatmul.bf16.gmra.mxu0 %v1725
      %v1784 = vpop.f32.mrf.mxu0
      %v1785 = vadd.f32 0.0, %v1784
      %v1786 = vpop.f32.mrf.mxu0
      %v1787 = vadd.f32 0.0, %v1786
      %1788 = vmatmul.bf16.gmra.mxu0 %v1728
      %v1789 = vpop.f32.mrf.mxu0
      %v1790 = vadd.f32 0.0, %v1789
      %v1791 = vpop.f32.mrf.mxu0
      %v1792 = vadd.f32 0.0, %v1791
      %1793 = vmatmul.bf16.gmra.mxu0 %v1731
      %v1794 = vpop.f32.mrf.mxu0
      %v1795 = vadd.f32 0.0, %v1794
      %v1796 = vpop.f32.mrf.mxu0
      %v1797 = vadd.f32 0.0, %v1796
      %1798 = vmatmul.bf16.gmra.mxu0 %v1734
      %v1799 = vpop.f32.mrf.mxu0
      %v1800 = vadd.f32 0.0, %v1799
      %v1801 = vpop.f32.mrf.mxu0
      %v1802 = vadd.f32 0.0, %v1801
      %1803 = vmatmul.bf16.gmra.mxu0 %v1737
      %v1804 = vpop.f32.mrf.mxu0
      %v1805 = vadd.f32 0.0, %v1804
      %v1806 = vpop.f32.mrf.mxu0
      %v1807 = vadd.f32 0.0, %v1806
      %1808 = vmatmul.bf16.gmra.mxu0 %v1740
      %v1809 = vpop.f32.mrf.mxu0
      %v1810 = vadd.f32 0.0, %v1809
      %v1811 = vpop.f32.mrf.mxu0
      %v1812 = vadd.f32 0.0, %v1811
      %1813 = vmatmul.bf16.gmra.mxu0 %v1743
      %v1814 = vpop.f32.mrf.mxu0
      %v1815 = vadd.f32 0.0, %v1814
      %v1816 = vpop.f32.mrf.mxu0
      %v1817 = vadd.f32 0.0, %v1816
      %1818 = vmatmul.bf16.gmra.mxu0 %v1746
      %v1819 = vpop.f32.mrf.mxu0
      %v1820 = vadd.f32 0.0, %v1819
      %v1821 = vpop.f32.mrf.mxu0
      %v1822 = vadd.f32 0.0, %v1821
      %1823 = vmatmul.bf16.gmra.mxu0 %v1749
      %v1824 = vpop.f32.mrf.mxu0
      %v1825 = vadd.f32 0.0, %v1824
      %v1826 = vpop.f32.mrf.mxu0
      %v1827 = vadd.f32 0.0, %v1826
      %1828 = vmatmul.bf16.gmra.mxu0 %v1752
      %v1829 = vpop.f32.mrf.mxu0
      %v1830 = vadd.f32 0.0, %v1829
      %v1831 = vpop.f32.mrf.mxu0
      %v1832 = vadd.f32 0.0, %v1831
      %1833 = vmatmul.bf16.gmra.mxu0 %v1755
      %v1834 = vpop.f32.mrf.mxu0
      %v1835 = vadd.f32 0.0, %v1834
      %v1836 = vpop.f32.mrf.mxu0
      %v1837 = vadd.f32 0.0, %v1836
      %1838 = vmatmul.bf16.gmra.mxu0 %v1758
      %v1839 = vpop.f32.mrf.mxu0
      %v1840 = vadd.f32 0.0, %v1839
      %v1841 = vpop.f32.mrf.mxu0
      %v1842 = vadd.f32 0.0, %v1841
      %1843 = vmatmul.bf16.gmra.mxu0 %v1761
      %v1844 = vpop.f32.mrf.mxu0
      %v1845 = vadd.f32 0.0, %v1844
      %v1846 = vpop.f32.mrf.mxu0
      %v1847 = vadd.f32 0.0, %v1846
      %1848 = vmatmul.bf16.gmra.mxu0 %v1764
      %v1849 = vpop.f32.mrf.mxu0
      %v1850 = vadd.f32 0.0, %v1849
      %v1851 = vpop.f32.mrf.mxu0
      %v1852 = vadd.f32 0.0, %v1851
      %1853 = vmatmul.bf16.gmra.mxu0 %v1767
      %v1854 = vpop.f32.mrf.mxu0
      %v1855 = vadd.f32 0.0, %v1854
      %v1856 = vpop.f32.mrf.mxu0
      %v1857 = vadd.f32 0.0, %v1856
      %1858 = vmatmul.bf16.gmra.mxu0 %v1770
      %v1859 = vpop.f32.mrf.mxu0
      %v1860 = vadd.f32 0.0, %v1859
      %v1861 = vpop.f32.mrf.mxu0
      %v1862 = vadd.f32 0.0, %v1861
      %1863 = vdwg.mxu0
      %v1864 = vadd.f32 %v1639, %v1785
      %v1865 = vadd.f32 %v1640, %v1787
      %v1866 = vadd.f32 %v1641, %v1790
      %v1867 = vadd.f32 %v1642, %v1792
      %v1868 = vadd.f32 %v1643, %v1795
      %v1869 = vadd.f32 %v1644, %v1797
      %v1870 = vadd.f32 %v1645, %v1800
      %v1871 = vadd.f32 %v1646, %v1802
      %v1872 = vadd.f32 %v1647, %v1805
      %v1873 = vadd.f32 %v1648, %v1807
      %v1874 = vadd.f32 %v1649, %v1810
      %v1875 = vadd.f32 %v1650, %v1812
      %v1876 = vadd.f32 %v1651, %v1815
      %v1877 = vadd.f32 %v1652, %v1817
      %v1878 = vadd.f32 %v1653, %v1820
      %v1879 = vadd.f32 %v1654, %v1822
      %v1880 = vadd.f32 %v1655, %v1825
      %v1881 = vadd.f32 %v1656, %v1827
      %v1882 = vadd.f32 %v1657, %v1830
      %v1883 = vadd.f32 %v1658, %v1832
      %v1884 = vadd.f32 %v1659, %v1835
      %v1885 = vadd.f32 %v1660, %v1837
      %v1886 = vadd.f32 %v1661, %v1840
      %v1887 = vadd.f32 %v1662, %v1842
      %v1888 = vadd.f32 %v1663, %v1845
      %v1889 = vadd.f32 %v1664, %v1847
      %v1890 = vadd.f32 %v1665, %v1850
      %v1891 = vadd.f32 %v1666, %v1852
      %v1892 = vadd.f32 %v1667, %v1855
      %v1893 = vadd.f32 %v1668, %v1857
      %v1894 = vadd.f32 %v1669, %v1860
      %v1895 = vadd.f32 %v1670, %v1862
      %v1896 = vld [vmem:[%s1449 + $0x2] sm:$0xff]
      %v1897 = vld [vmem:[%s1449 + $0xa] sm:$0xff]
      %v1898 = vld [vmem:[%s1449 + $0x1a] sm:$0xff]
      %v1899 = vld [vmem:[%s1449 + $0x22] sm:$0xff]
      %v1900 = vld [vmem:[%s1449 + $0x32] sm:$0xff]
      %v1901 = vld [vmem:[%s1449 + $0x3a] sm:$0xff]
      %v1902 = vld [vmem:[%s1449 + $0x4a] sm:$0xff]
      %v1903 = vld [vmem:[%s1449 + $0x52] sm:$0xff]
      %v1904 = vld [vmem:[%s1449 + $0x62] sm:$0xff]
      %v1905 = vld [vmem:[%s1449 + $0x6a] sm:$0xff]
      %v1906 = vld [vmem:[%s1449 + $0x7a] sm:$0xff]
      %v1907 = vld [vmem:[%s1449 + $0x82] sm:$0xff]
      %v1908 = vld [vmem:[%s1449 + $0x92] sm:$0xff]
      %v1909 = vld [vmem:[%s1449 + $0x9a] sm:$0xff]
      %v1910 = vld [vmem:[%s1449 + $0xaa] sm:$0xff]
      %v1911 = vld [vmem:[%s1449 + $0xb2] sm:$0xff]
      %v1912 = vld [vmem:[%s1449 + $0xc2] sm:$0xff]
      %v1913 = vld [vmem:[%s1449 + $0xca] sm:$0xff]
      %v1914 = vld [vmem:[%s1449 + $0xda] sm:$0xff]
      %v1915 = vld [vmem:[%s1449 + $0xe2] sm:$0xff]
      %v1916 = vld [vmem:[%s1449 + $0xf2] sm:$0xff]
      %v1917 = vld [vmem:[%s1449 + $0xfa] sm:$0xff]
      %v1918 = vld [vmem:[%s1449 + $0x10a] sm:$0xff]
      %v1919 = vld [vmem:[%s1449 + $0x112] sm:$0xff]
      %v1920 = vld [vmem:[%s1449 + $0x122] sm:$0xff]
      %v1921 = vld [vmem:[%s1449 + $0x12a] sm:$0xff]
      %v1922 = vld [vmem:[%s1449 + $0x13a] sm:$0xff]
      %v1923 = vld [vmem:[%s1449 + $0x142] sm:$0xff]
      %v1924 = vld [vmem:[%s1449 + $0x152] sm:$0xff]
      %v1925 = vld [vmem:[%s1449 + $0x15a] sm:$0xff]
      %v1926 = vld [vmem:[%s1449 + $0x16a] sm:$0xff]
      %v1927 = vld [vmem:[%s1449 + $0x172] sm:$0xff]
      %v1928 = vld [vmem:[%s1 + $0x10] sm:$0x3]
      %v1929 = vpack.c.bf16 %v1897, %v1896
      %v1930 = vpack.c.bf16 %v1899, %v1898
      %v1931 = vpack.c.bf16 %v1901, %v1900
      %v1932 = vpack.c.bf16 %v1903, %v1902
      %v1933 = vpack.c.bf16 %v1905, %v1904
      %v1934 = vpack.c.bf16 %v1907, %v1906
      %v1935 = vpack.c.bf16 %v1909, %v1908
      %v1936 = vpack.c.bf16 %v1911, %v1910
      %v1937 = vpack.c.bf16 %v1913, %v1912
      %v1938 = vpack.c.bf16 %v1915, %v1914
      %v1939 = vpack.c.bf16 %v1917, %v1916
      %v1940 = vpack.c.bf16 %v1919, %v1918
      %v1941 = vpack.c.bf16 %v1921, %v1920
      %v1942 = vpack.c.bf16 %v1923, %v1922
      %v1943 = vpack.c.bf16 %v1925, %v1924
      %v1944 = vpack.c.bf16 %v1927, %v1926
      %v1946 = vsel %vm274, %v1929, 0
      %v1949 = vsel %vm274, %v1930, 0
      %v1952 = vsel %vm274, %v1931, 0
      %v1955 = vsel %vm274, %v1932, 0
      %v1958 = vsel %vm274, %v1933, 0
      %v1961 = vsel %vm274, %v1934, 0
      %v1964 = vsel %vm274, %v1935, 0
      %v1967 = vsel %vm274, %v1936, 0
      %v1970 = vsel %vm274, %v1937, 0
      %v1973 = vsel %vm274, %v1938, 0
      %v1976 = vsel %vm274, %v1939, 0
      %v1979 = vsel %vm274, %v1940, 0
      %v1982 = vsel %vm274, %v1941, 0
      %v1985 = vsel %vm274, %v1942, 0
      %v1988 = vsel %vm274, %v1943, 0
      %v1991 = vsel %vm274, %v1944, 0
      %v1994 = vsel %vm323, %v1928, 0
      %1996 = vmatpush.bf16.msra.mxu0 0
      %1997 = vmatpush.bf16.msra.mxu0 0
      %1998 = vmatpush.bf16.msra.mxu0 0
      %1999 = vmatpush.bf16.msra.mxu0 0
      %2000 = vmatpush.bf16.msra.mxu0 0
      %2001 = vmatpush.bf16.msra.mxu0 0
      %2002 = vmatpush.bf16.msra.mxu0 0
      %2003 = vmatpush.bf16.msra.mxu0 %v1994
      %2004 = vmatmul.bf16.gmra.mxu0 %v1946
      %v2005 = vpop.f32.mrf.mxu0
      %v2006 = vadd.f32 0.0, %v2005
      %v2007 = vpop.f32.mrf.mxu0
      %v2008 = vadd.f32 0.0, %v2007
      %2009 = vmatmul.bf16.gmra.mxu0 %v1949
      %v2010 = vpop.f32.mrf.mxu0
      %v2011 = vadd.f32 0.0, %v2010
      %v2012 = vpop.f32.mrf.mxu0
      %v2013 = vadd.f32 0.0, %v2012
      %2014 = vmatmul.bf16.gmra.mxu0 %v1952
      %v2015 = vpop.f32.mrf.mxu0
      %v2016 = vadd.f32 0.0, %v2015
      %v2017 = vpop.f32.mrf.mxu0
      %v2018 = vadd.f32 0.0, %v2017
      %2019 = vmatmul.bf16.gmra.mxu0 %v1955
      %v2020 = vpop.f32.mrf.mxu0
      %v2021 = vadd.f32 0.0, %v2020
      %v2022 = vpop.f32.mrf.mxu0
      %v2023 = vadd.f32 0.0, %v2022
      %2024 = vmatmul.bf16.gmra.mxu0 %v1958
      %v2025 = vpop.f32.mrf.mxu0
      %v2026 = vadd.f32 0.0, %v2025
      %v2027 = vpop.f32.mrf.mxu0
      %v2028 = vadd.f32 0.0, %v2027
      %2029 = vmatmul.bf16.gmra.mxu0 %v1961
      %v2030 = vpop.f32.mrf.mxu0
      %v2031 = vadd.f32 0.0, %v2030
      %v2032 = vpop.f32.mrf.mxu0
      %v2033 = vadd.f32 0.0, %v2032
      %2034 = vmatmul.bf16.gmra.mxu0 %v1964
      %v2035 = vpop.f32.mrf.mxu0
      %v2036 = vadd.f32 0.0, %v2035
      %v2037 = vpop.f32.mrf.mxu0
      %v2038 = vadd.f32 0.0, %v2037
      %2039 = vmatmul.bf16.gmra.mxu0 %v1967
      %v2040 = vpop.f32.mrf.mxu0
      %v2041 = vadd.f32 0.0, %v2040
      %v2042 = vpop.f32.mrf.mxu0
      %v2043 = vadd.f32 0.0, %v2042
      %2044 = vmatmul.bf16.gmra.mxu0 %v1970
      %v2045 = vpop.f32.mrf.mxu0
      %v2046 = vadd.f32 0.0, %v2045
      %v2047 = vpop.f32.mrf.mxu0
      %v2048 = vadd.f32 0.0, %v2047
      %2049 = vmatmul.bf16.gmra.mxu0 %v1973
      %v2050 = vpop.f32.mrf.mxu0
      %v2051 = vadd.f32 0.0, %v2050
      %v2052 = vpop.f32.mrf.mxu0
      %v2053 = vadd.f32 0.0, %v2052
      %2054 = vmatmul.bf16.gmra.mxu0 %v1976
      %v2055 = vpop.f32.mrf.mxu0
      %v2056 = vadd.f32 0.0, %v2055
      %v2057 = vpop.f32.mrf.mxu0
      %v2058 = vadd.f32 0.0, %v2057
      %2059 = vmatmul.bf16.gmra.mxu0 %v1979
      %v2060 = vpop.f32.mrf.mxu0
      %v2061 = vadd.f32 0.0, %v2060
      %v2062 = vpop.f32.mrf.mxu0
      %v2063 = vadd.f32 0.0, %v2062
      %2064 = vmatmul.bf16.gmra.mxu0 %v1982
      %v2065 = vpop.f32.mrf.mxu0
      %v2066 = vadd.f32 0.0, %v2065
      %v2067 = vpop.f32.mrf.mxu0
      %v2068 = vadd.f32 0.0, %v2067
      %2069 = vmatmul.bf16.gmra.mxu0 %v1985
      %v2070 = vpop.f32.mrf.mxu0
      %v2071 = vadd.f32 0.0, %v2070
      %v2072 = vpop.f32.mrf.mxu0
      %v2073 = vadd.f32 0.0, %v2072
      %2074 = vmatmul.bf16.gmra.mxu0 %v1988
      %v2075 = vpop.f32.mrf.mxu0
      %v2076 = vadd.f32 0.0, %v2075
      %v2077 = vpop.f32.mrf.mxu0
      %v2078 = vadd.f32 0.0, %v2077
      %2079 = vmatmul.bf16.gmra.mxu0 %v1991
      %v2080 = vpop.f32.mrf.mxu0
      %v2081 = vadd.f32 0.0, %v2080
      %v2082 = vpop.f32.mrf.mxu0
      %v2083 = vadd.f32 0.0, %v2082
      %2084 = vdwg.mxu0
      %v2085 = vadd.f32 %v1864, %v2006
      %v2086 = vadd.f32 %v1865, %v2008
      %v2087 = vadd.f32 %v1866, %v2011
      %v2088 = vadd.f32 %v1867, %v2013
      %v2089 = vadd.f32 %v1868, %v2016
      %v2090 = vadd.f32 %v1869, %v2018
      %v2091 = vadd.f32 %v1870, %v2021
      %v2092 = vadd.f32 %v1871, %v2023
      %v2093 = vadd.f32 %v1872, %v2026
      %v2094 = vadd.f32 %v1873, %v2028
      %v2095 = vadd.f32 %v1874, %v2031
      %v2096 = vadd.f32 %v1875, %v2033
      %v2097 = vadd.f32 %v1876, %v2036
      %v2098 = vadd.f32 %v1877, %v2038
      %v2099 = vadd.f32 %v1878, %v2041
      %v2100 = vadd.f32 %v1879, %v2043
      %v2101 = vadd.f32 %v1880, %v2046
      %v2102 = vadd.f32 %v1881, %v2048
      %v2103 = vadd.f32 %v1882, %v2051
      %v2104 = vadd.f32 %v1883, %v2053
      %v2105 = vadd.f32 %v1884, %v2056
      %v2106 = vadd.f32 %v1885, %v2058
      %v2107 = vadd.f32 %v1886, %v2061
      %v2108 = vadd.f32 %v1887, %v2063
      %v2109 = vadd.f32 %v1888, %v2066
      %v2110 = vadd.f32 %v1889, %v2068
      %v2111 = vadd.f32 %v1890, %v2071
      %v2112 = vadd.f32 %v1891, %v2073
      %v2113 = vadd.f32 %v1892, %v2076
      %v2114 = vadd.f32 %v1893, %v2078
      %v2115 = vadd.f32 %v1894, %v2081
      %v2116 = vadd.f32 %v1895, %v2083
      %v2117 = vld [vmem:[%s2] sm:$0x3]
      %v2118 = vperm.slane %v2117, 0
      %v2119 = vmul.f32 %v2085, %v2118
      %v2120 = vmul.f32 %v2086, %v2118
      %v2121 = vmul.f32 %v2087, %v2118
      %v2122 = vmul.f32 %v2088, %v2118
      %v2123 = vmul.f32 %v2089, %v2118
      %v2124 = vmul.f32 %v2090, %v2118
      %v2125 = vmul.f32 %v2091, %v2118
      %v2126 = vmul.f32 %v2092, %v2118
      %v2127 = vmul.f32 %v2093, %v2118
      %v2128 = vmul.f32 %v2094, %v2118
      %v2129 = vmul.f32 %v2095, %v2118
      %v2130 = vmul.f32 %v2096, %v2118
      %v2131 = vmul.f32 %v2097, %v2118
      %v2132 = vmul.f32 %v2098, %v2118
      %v2133 = vmul.f32 %v2099, %v2118
      %v2134 = vmul.f32 %v2100, %v2118
      %v2135 = vmul.f32 %v2101, %v2118
      %v2136 = vmul.f32 %v2102, %v2118
      %v2137 = vmul.f32 %v2103, %v2118
      %v2138 = vmul.f32 %v2104, %v2118
      %v2139 = vmul.f32 %v2105, %v2118
      %v2140 = vmul.f32 %v2106, %v2118
      %v2141 = vmul.f32 %v2107, %v2118
      %v2142 = vmul.f32 %v2108, %v2118
      %v2143 = vmul.f32 %v2109, %v2118
      %v2144 = vmul.f32 %v2110, %v2118
      %v2145 = vmul.f32 %v2111, %v2118
      %v2146 = vmul.f32 %v2112, %v2118
      %v2147 = vmul.f32 %v2113, %v2118
      %v2148 = vmul.f32 %v2114, %v2118
      %v2149 = vmul.f32 %v2115, %v2118
      %v2150 = vmul.f32 %v2116, %v2118
      %v2151 = vperm.slane %v2117, 1
      %v2152 = vadd.f32 %v2119, %v2151
      %v2153 = vadd.f32 %v2120, %v2151
      %v2154 = vadd.f32 %v2121, %v2151
      %v2155 = vadd.f32 %v2122, %v2151
      %v2156 = vadd.f32 %v2123, %v2151
      %v2157 = vadd.f32 %v2124, %v2151
      %v2158 = vadd.f32 %v2125, %v2151
      %v2159 = vadd.f32 %v2126, %v2151
      %v2160 = vadd.f32 %v2127, %v2151
      %v2161 = vadd.f32 %v2128, %v2151
      %v2162 = vadd.f32 %v2129, %v2151
      %v2163 = vadd.f32 %v2130, %v2151
      %v2164 = vadd.f32 %v2131, %v2151
      %v2165 = vadd.f32 %v2132, %v2151
      %v2166 = vadd.f32 %v2133, %v2151
      %v2167 = vadd.f32 %v2134, %v2151
      %v2168 = vadd.f32 %v2135, %v2151
      %v2169 = vadd.f32 %v2136, %v2151
      %v2170 = vadd.f32 %v2137, %v2151
      %v2171 = vadd.f32 %v2138, %v2151
      %v2172 = vadd.f32 %v2139, %v2151
      %v2173 = vadd.f32 %v2140, %v2151
      %v2174 = vadd.f32 %v2141, %v2151
      %v2175 = vadd.f32 %v2142, %v2151
      %v2176 = vadd.f32 %v2143, %v2151
      %v2177 = vadd.f32 %v2144, %v2151
      %v2178 = vadd.f32 %v2145, %v2151
      %v2179 = vadd.f32 %v2146, %v2151
      %v2180 = vadd.f32 %v2147, %v2151
      %v2181 = vadd.f32 %v2148, %v2151
      %v2182 = vadd.f32 %v2149, %v2151
      %v2183 = vadd.f32 %v2150, %v2151
      %v2184 = vmax.f32 %v2152, 0.0
      %v2185 = vmax.f32 %v2153, 0.0
      %v2186 = vmax.f32 %v2154, 0.0
      %v2187 = vmax.f32 %v2155, 0.0
      %v2188 = vmax.f32 %v2156, 0.0
      %v2189 = vmax.f32 %v2157, 0.0
      %v2190 = vmax.f32 %v2158, 0.0
      %v2191 = vmax.f32 %v2159, 0.0
      %v2192 = vmax.f32 %v2160, 0.0
      %v2193 = vmax.f32 %v2161, 0.0
      %v2194 = vmax.f32 %v2162, 0.0
      %v2195 = vmax.f32 %v2163, 0.0
      %v2196 = vmax.f32 %v2164, 0.0
      %v2197 = vmax.f32 %v2165, 0.0
      %v2198 = vmax.f32 %v2166, 0.0
      %v2199 = vmax.f32 %v2167, 0.0
      %v2200 = vmax.f32 %v2168, 0.0
      %v2201 = vmax.f32 %v2169, 0.0
      %v2202 = vmax.f32 %v2170, 0.0
      %v2203 = vmax.f32 %v2171, 0.0
      %v2204 = vmax.f32 %v2172, 0.0
      %v2205 = vmax.f32 %v2173, 0.0
      %v2206 = vmax.f32 %v2174, 0.0
      %v2207 = vmax.f32 %v2175, 0.0
      %v2208 = vmax.f32 %v2176, 0.0
      %v2209 = vmax.f32 %v2177, 0.0
      %v2210 = vmax.f32 %v2178, 0.0
      %v2211 = vmax.f32 %v2179, 0.0
      %v2212 = vmax.f32 %v2180, 0.0
      %v2213 = vmax.f32 %v2181, 0.0
      %v2214 = vmax.f32 %v2182, 0.0
      %v2215 = vmax.f32 %v2183, 0.0
      %vm2216 = vcmask 64512
      %2217 = vst.msk [vmem:[%s170] sm:$0xff] %vm2216, %v2184
      %2218 = vst.msk [vmem:[%s170 + $0x8] sm:$0xff] %vm2216, %v2185
      %2219 = vst.msk [vmem:[%s170 + $0x10] sm:$0xff] %vm2216, %v2186
      %2220 = vst.msk [vmem:[%s170 + $0x18] sm:$0xff] %vm2216, %v2187
      %2221 = vst.msk [vmem:[%s170 + $0x20] sm:$0xff] %vm2216, %v2188
      %2222 = vst.msk [vmem:[%s170 + $0x28] sm:$0xff] %vm2216, %v2189
      %2223 = vst.msk [vmem:[%s170 + $0x30] sm:$0xff] %vm2216, %v2190
      %2224 = vst.msk [vmem:[%s170 + $0x38] sm:$0xff] %vm2216, %v2191
      %2225 = vst.msk [vmem:[%s170 + $0x40] sm:$0xff] %vm2216, %v2192
      %2226 = vst.msk [vmem:[%s170 + $0x48] sm:$0xff] %vm2216, %v2193
      %2227 = vst.msk [vmem:[%s170 + $0x50] sm:$0xff] %vm2216, %v2194
      %2228 = vst.msk [vmem:[%s170 + $0x58] sm:$0xff] %vm2216, %v2195
      %2229 = vst.msk [vmem:[%s170 + $0x60] sm:$0xff] %vm2216, %v2196
      %2230 = vst.msk [vmem:[%s170 + $0x68] sm:$0xff] %vm2216, %v2197
      %2231 = vst.msk [vmem:[%s170 + $0x70] sm:$0xff] %vm2216, %v2198
      %2232 = vst.msk [vmem:[%s170 + $0x78] sm:$0xff] %vm2216, %v2199
      %2233 = vst.msk [vmem:[%s170 + $0x80] sm:$0xff] %vm2216, %v2200
      %2234 = vst.msk [vmem:[%s170 + $0x88] sm:$0xff] %vm2216, %v2201
      %2235 = vst.msk [vmem:[%s170 + $0x90] sm:$0xff] %vm2216, %v2202
      %2236 = vst.msk [vmem:[%s170 + $0x98] sm:$0xff] %vm2216, %v2203
      %2237 = vst.msk [vmem:[%s170 + $0xa0] sm:$0xff] %vm2216, %v2204
      %2238 = vst.msk [vmem:[%s170 + $0xa8] sm:$0xff] %vm2216, %v2205
      %2239 = vst.msk [vmem:[%s170 + $0xb0] sm:$0xff] %vm2216, %v2206
      %2240 = vst.msk [vmem:[%s170 + $0xb8] sm:$0xff] %vm2216, %v2207
      %2241 = vst.msk [vmem:[%s170 + $0xc0] sm:$0xff] %vm2216, %v2208
      %2242 = vst.msk [vmem:[%s170 + $0xc8] sm:$0xff] %vm2216, %v2209
      %2243 = vst.msk [vmem:[%s170 + $0xd0] sm:$0xff] %vm2216, %v2210
      %2244 = vst.msk [vmem:[%s170 + $0xd8] sm:$0xff] %vm2216, %v2211
      %2245 = vst.msk [vmem:[%s170 + $0xe0] sm:$0xff] %vm2216, %v2212
      %2246 = vst.msk [vmem:[%s170 + $0xe8] sm:$0xff] %vm2216, %v2213
      %2247 = vst.msk [vmem:[%s170 + $0xf0] sm:$0xff] %vm2216, %v2214
      %2248 = vst.msk [vmem:[%s170 + $0xf8] sm:$0xff] %vm2216, %v2215
      %p2249 = scmp.lt.s32.totalorder %s14, 1
      %s2250 = scalar_select %p2249, %s14, 1
      %s2251 = smul.addr %s2250, 32
      %s2252 = smul.addr %s2251, 8
      %s2253 = scalar_lea.vmem %s3, %s2252
      // Predicated region
      $region33: #{tpu_custom_call.1} parent=31 // pred_check
        %p2254 = pneg %p100
      $region34: #{tpu_custom_call.1} parent=31 // pred_check_branch
        %2256 = sbr.rel (%p2254) target = $region36
      $region35: #{tpu_custom_call.1} parent=31 // pred_region
        _
      $region36: #{tpu_custom_call.1} parent=31 // pred_fallthru
        _
    $region32: #{tpu_custom_call.1} parent=5 // pred_fallthru
      _
    %p2257 = scmp.le.s32.totalorder 2, %s9
    // Predicated region
    $region37: #{tpu_custom_call.1} parent=5 // pred_check
      %p2258 = pneg %p2257
    $region38: #{tpu_custom_call.1} parent=5 // pred_check_branch
      %2260 = sbr.rel (%p2258) target = $region40
    $region39: #{tpu_custom_call.1} parent=5 // pred_region
      %s2261 = ssub.s32 %s9, 2
      // Predicated region
      $region41: #{tpu_custom_call.1} parent=39 // pred_check
        %p2262 = pneg %p106
      $region42: #{tpu_custom_call.1} parent=39 // pred_check_branch
        %2264 = sbr.rel (%p2262) target = $region44
      $region43: #{tpu_custom_call.1} parent=39 // pred_region
        %p2265 = scmp.lt.s32.totalorder %s15, 1
        %s2266 = scalar_select %p2265, %s15, 1
        %s2267 = smul.addr %s2266, 32
        %s2268 = smul.addr %s2267, 8
        %s2269 = scalar_lea.vmem %s3, %s2268
      $region44: #{tpu_custom_call.1} parent=39 // pred_fallthru
        _
    $region40: #{tpu_custom_call.1} parent=5 // pred_fallthru
      _
  $region6: #{tpu_custom_call.1} parent=0 // loop_footer
    %s13 = sadd.s32 1, %s9
  $region7: #{tpu_custom_call.1} parent=0 // loop_footer_branch
    %8 = sbr.rel target = $region3
  $region8: #{tpu_custom_call.1} parent=0 // loop_exit
    _

</llo_original>
